<compile_context>
chip_gen: v6e
topology: v6e:2x2x1
jax: 0.10.0
libtpu: 0.0.40
codegen_flags: <defaults>
</compile_context>

<pallas_src>
import jax
import jax.numpy as jnp
from jax.experimental import pallas as pl
from jax.experimental.pallas import tpu as pltpu

_INNER_MLP_MULT = 2
_BN_EPS = 1e-5


# ---------------------------------------------------------------------------
# Generation-aware VMEM budget (v5e/v6e: 128 MiB physical, v7x: 64 MiB).
# ---------------------------------------------------------------------------
def _pick_vmem_limit_bytes():
    try:
        cap = int(pltpu.get_tpu_info().vmem_capacity_bytes)
        # leave headroom for compiler scratch; never exceed ~112 MiB.
        return int(max(32 << 20, min(cap - (16 << 20), 112 << 20)))
    except Exception:
        return None  # non-TPU / interpret: leave the default limit alone


_VMEM_LIMIT_BYTES = _pick_vmem_limit_bytes()


# ---------------------------------------------------------------------------
# Kernel helpers
# ---------------------------------------------------------------------------
def _dot_f32(a, b):
    """MXU matmul, f32 operands / f32 accumulation (backend-portable)."""
    return jnp.dot(a, b, preferred_element_type=jnp.float32)


def _bn_relu(h, gamma, beta):
    """Training-mode BatchNorm1d (biased batch var) + ReLU, single pass.

    gamma / beta are [1, C] rows; variance via E[x^2] - mu^2 (no centred temp).
    """
    mu = jnp.mean(h, axis=0, keepdims=True)
    ms = jnp.mean(h * h, axis=0, keepdims=True)
    var = jnp.maximum(ms - mu * mu, 0.0)
    y = (h - mu) * jax.lax.rsqrt(var + _BN_EPS) * gamma + beta
    return jnp.maximum(y, 0.0)


# ---------------------------------------------------------------------------
# Fused kernel: edge MLP -> scatter-add (incidence contraction) -> node MLP
# ---------------------------------------------------------------------------
def _edge_node_kernel(idx_ref, node_ref, edge_ref,
                      w_nodeproj_ref, w_pair1_ref, w_pair2_ref,
                      gb1_ref, gb2_ref,
                      node_out_ref, edge_out_ref):
    f32 = jnp.float32

    # Hoisted single upcast of the bf16 activations.
    node = node_ref[...].astype(f32)          # [N, H]
    edge = edge_ref[...].astype(f32)          # [R, H]   (R = 2E)
    idx = idx_ref[...]                        # [R, 2] int32: (own, partner)
    own = idx[:, 0:1]                         # [R, 1]
    par = idx[:, 1:2]                         # [R, 1]

    w_pair1 = w_pair1_ref[...]                # [2, H, inner]
    w_pair2 = w_pair2_ref[...]                # [2, inner, H]
    gb1 = gb1_ref[...]                        # [4, inner] (g_e, b_e, g_n, b_n)
    gb2 = gb2_ref[...]                        # [4, H]

    n_nodes = node.shape[0]
    n_rows = edge.shape[0]
    inner = gb1.shape[1]

    # --- all three node projections fused along the output dim: [N, 3*inner].
    proj = _dot_f32(node, w_nodeproj_ref[...])
    a = proj[:, :inner]                       # node @ W1e (gather path)
    b = proj[:, inner:2 * inner]              # node @ W1e (pair-sum path)
    g1_node = proj[:, 2 * inner:]             # node @ W1n (node MLP layer 1)

    # --- incidence built in-kernel from the index vector (values {0,1,2}: exact).
    col = jax.lax.broadcasted_iota(jnp.int32, (n_rows, n_nodes), 1)
    g_own = (own == col).astype(f32)          # [R, N] one-hot gather
    g_par = (par == col).astype(f32)          # [R, N] partner one-hot
    #   [gather | pair-sum] fused into one incidence matmul (deeper K = 2N).
    gsmat = jnp.concatenate([g_own, g_own + g_par], axis=1)   # [R, 2N]
    ab = jnp.concatenate([a, b], axis=0)                       # [2N, inner]

    # --- edge MLP layer 1:  cat([edge_rep, n2e, bcast]) @ W1  (split matmuls).
    h1 = _dot_f32(edge, w_pair1[0]) + _dot_f32(gsmat, ab)      # [R, inner]
    h1 = _bn_relu(h1, gb1[0:1, :], gb1[1:2, :])

    # --- edge MLP layer 2.
    edge_out = _bn_relu(_dot_f32(h1, w_pair2[0]), gb2[0:1, :], gb2[1:2, :])
    edge_out_ref[...] = edge_out.astype(edge_out_ref.dtype)    # [R, H]

    # --- edge -> node scatter-add: contract on the row axis (no transpose).
    e2n = jax.lax.dot_general(
        g_own, edge_out,
        dimension_numbers=(((0,), (0,)), ((), ())),
        preferred_element_type=f32)                            # [N, H]

    # --- node MLP layer 1:  cat([node_rep, edge2node]) @ V1  (split matmuls).
    g1 = g1_node + _dot_f32(e2n, w_pair1[1])                   # [N, inner]
    g1 = _bn_relu(g1, gb1[2:3, :], gb1[3:4, :])

    # --- node MLP layer 2.
    node_out = _bn_relu(_dot_f32(g1, w_pair2[1]), gb2[2:3, :], gb2[3:4, :])
    node_out_ref[...] = node_out.astype(node_out_ref.dtype)    # [N, H]


# ---------------------------------------------------------------------------
# Parameter packing: 5 arrays instead of 12 (fewer, larger DMAs).
# ---------------------------------------------------------------------------
def _pack_params(params, H):
    (w1n, g1n, b1n, w2n, g2n, b2n), (w1e, g1e, b1e, w2e, g2e, b2e) = params
    f32 = jnp.float32
    # node-consuming layer-1 blocks, fused along the output dim: [H, 3*inner]
    w_nodeproj = jnp.concatenate(
        [w1e[H:2 * H], w1e[2 * H:3 * H], w1n[0:H]], axis=1).astype(f32)
    # per-row-stream layer-1 blocks: [2, H, inner] (edge_rep row, edge2node row)
    w_pair1 = jnp.stack([w1e[0:H], w1n[H:2 * H]]).astype(f32)
    # layer-2 weights: [2, inner, H] (edge MLP, node MLP)
    w_pair2 = jnp.stack([w2e, w2n]).astype(f32)
    gb1 = jnp.stack([g1e, b1e, g1n, b1n]).astype(f32)          # [4, inner]
    gb2 = jnp.stack([g2e, b2e, g2n, b2n]).astype(f32)          # [4, H]
    return w_nodeproj, w_pair1, w_pair2, gb1, gb2


# ---------------------------------------------------------------------------
# Edge_node forward — one fused pallas_call
# ---------------------------------------------------------------------------
@jax.jit
def edge_node_forward(node_rep, edge_rep, edges, params):
    """
    node_rep : [N, H]     node features (ptensors0b)
    edge_rep : [2*E, H]   edge features, 2 atom-rows per edge (subgraphlayer1b)
    edges    : [E, 2]     int32 endpoint indices per edge
    """
    N, H = node_rep.shape
    R = edge_rep.shape[0]                     # = 2 * E

    # Raw index vectors only (no dense incidence matrices in HBM).
    idx_own = edges.reshape(-1).astype(jnp.int32)              # [2E]
    idx_par = edges[:, ::-1].reshape(-1).astype(jnp.int32)     # [2E] partner
    idx2 = jnp.stack([idx_own, idx_par], axis=1)               # [2E, 2]

    # Activations ship as bf16 (half the HBM->VMEM bytes); upcast in-kernel.
    node_bf = node_rep.astype(jnp.bfloat16)
    edge_bf = edge_rep.astype(jnp.bfloat16)

    w_nodeproj, w_pair1, w_pair2, gb1, gb2 = _pack_params(params, H)

    vmem = pl.BlockSpec(memory_space=pltpu.MemorySpace.VMEM)
    node_out, edge_out = pl.pallas_call(
        _edge_node_kernel,
        out_shape=(jax.ShapeDtypeStruct((N, H), jnp.float32),
                   jax.ShapeDtypeStruct((R, H), jnp.float32)),
        in_specs=[vmem] * 8,
        out_specs=(vmem, vmem),
        compiler_params=pltpu.CompilerParams(
            vmem_limit_bytes=_VMEM_LIMIT_BYTES),
    )(idx2, node_bf, edge_bf, w_nodeproj, w_pair1, w_pair2, gb1, gb2)

    return node_out, edge_out


# ---------------------------------------------------------------------------
# Parameter construction (deterministic; independent keys per tensor)
# ---------------------------------------------------------------------------
def _init_mlp_params(key, in_dim, hidden_dim):
    inner = hidden_dim * _INNER_MLP_MULT
    k1, k2, k3, k4, k5, k6 = jax.random.split(key, 6)
    w1 = jax.random.uniform(k1, (in_dim, inner), jnp.float32,
                            -1.0, 1.0) / jnp.sqrt(jnp.float32(in_dim))
    g1 = 1.0 + 0.05 * jax.random.normal(k2, (inner,), jnp.float32)
    b1 = 0.05 * jax.random.normal(k3, (inner,), jnp.float32)
    w2 = jax.random.uniform(k4, (inner, hidden_dim), jnp.float32,
                            -1.0, 1.0) / jnp.sqrt(jnp.float32(inner))
    g2 = 1.0 + 0.05 * jax.random.normal(k5, (hidden_dim,), jnp.float32)
    b2 = 0.05 * jax.random.normal(k6, (hidden_dim,), jnp.float32)
    return (w1, g1, b1, w2, g2, b2)


# ---------------------------------------------------------------------------
# Pure-f32 JAX reference (concat / gather / scatter formulation)
# ---------------------------------------------------------------------------
def _mlp_ref(x, params):
    w1, g1, b1, w2, g2, b2 = params

    def bn_relu(h, g, b):
        mu = h.mean(axis=0, keepdims=True)
        var = ((h - mu) ** 2).mean(axis=0, keepdims=True)
        return jnp.maximum((h - mu) / jnp.sqrt(var + _BN_EPS) * g + b, 0.0)

    h = bn_relu(x @ w1, g1, b1)
    return bn_relu(h @ w2, g2, b2)


def _reference_forward(node_rep, edge_rep, edges, params):
    node_params, edge_params = params
    N, H = node_rep.shape
    E = edges.shape[0]
    idx = edges.reshape(-1)
    n2e = node_rep[idx]                                              # [2E, H]
    bcast = jnp.repeat(n2e.reshape(E, 2, H).sum(axis=1), 2, axis=0)  # [2E, H]
    edge_in = jnp.concatenate([edge_rep, n2e, bcast], axis=-1)       # [2E, 3H]
    edge_out = _mlp_ref(edge_in, edge_params)                        # [2E, H]
    e2n = jnp.zeros((N, H), jnp.float32).at[idx].add(edge_out)       # [N, H]
    node_in = jnp.concatenate([node_rep, e2n], axis=-1)              # [N, 2H]
    node_out = _mlp_ref(node_in, node_params)                        # [N, H]
    return node_out, edge_out


# ---------------------------------------------------------------------------
if __name__ == "__main__":
    hidden_dim = 32
    num_nodes = 16

    # Deterministic small graph: a 16-node ring plus 8 chords -> 24 edges.
    ring = [(i, (i + 1) % num_nodes) for i in range(num_nodes)]
    chords = [(i, (i + 5) % num_nodes) for i in range(8)]
    edges = jnp.asarray(ring + chords, dtype=jnp.int32)       # [24, 2]
    num_edges = edges.shape[0]

    key = jax.random.PRNGKey(0)
    k_node, k_edge, k_pn, k_pe = jax.random.split(key, 4)
    node_rep = jax.random.normal(k_node, (num_nodes, hidden_dim), jnp.float32)
    edge_rep = jax.random.normal(k_edge, (2 * num_edges, hidden_dim),
                                 jnp.float32)

    params = (_init_mlp_params(k_pn, 2 * hidden_dim, hidden_dim),
              _init_mlp_params(k_pe, 3 * hidden_dim, hidden_dim))

    node_out, edge_out = edge_node_forward(node_rep, edge_rep, edges, params)
    node_out = jax.block_until_ready(node_out)
    edge_out = jax.block_until_ready(edge_out)

    assert node_out.shape == (num_nodes, hidden_dim)
    assert edge_out.shape == (2 * num_edges, hidden_dim)
    assert bool(jnp.all(jnp.isfinite(node_out)))
    assert bool(jnp.all(jnp.isfinite(edge_out)))

    # Correctness: f32 reference fed the SAME bf16-rounded activations the
    # kernel consumes, so only matmul re-association / BN formula / MXU
    # precision differences remain.  Tolerance tightened 10x vs. before.
    node_q = node_rep.astype(jnp.bfloat16).astype(jnp.float32)
    edge_q = edge_rep.astype(jnp.bfloat16).astype(jnp.float32)
    node_want, edge_want = _reference_forward(node_q, edge_q, edges, params)
    assert float(jnp.max(jnp.abs(edge_out - edge_want))) < 5e-2
    assert float(jnp.max(jnp.abs(node_out - node_want))) < 5e-2

    print("KERNEL_OK")
</pallas_src>

<mosaic_0001>
module attributes {stable_mosaic.version = 11 : i64} {
  func.func @_edge_node_kernel(%arg0: memref<48x2xi32, #tpu.memory_space<vmem>>, %arg1: memref<16x32xbf16, #tpu.memory_space<vmem>>, %arg2: memref<48x32xbf16, #tpu.memory_space<vmem>>, %arg3: memref<32x192xf32, #tpu.memory_space<vmem>>, %arg4: memref<2x32x64xf32, #tpu.memory_space<vmem>>, %arg5: memref<2x64x32xf32, #tpu.memory_space<vmem>>, %arg6: memref<4x64xf32, #tpu.memory_space<vmem>>, %arg7: memref<4x32xf32, #tpu.memory_space<vmem>>, %arg8: memref<16x32xf32, #tpu.memory_space<vmem>>, %arg9: memref<48x32xf32, #tpu.memory_space<vmem>>) attributes {dimension_semantics = [], scalar_prefetch = 0 : i64, scratch_operands = 0 : i64, tpu.core_type = #tpu.core_type<tc>} {
    %c0 = arith.constant 0 : index
    %c0_0 = arith.constant 0 : index
    %0 = vector.load %arg1[%c0, %c0_0] : memref<16x32xbf16, #tpu.memory_space<vmem>>, vector<16x32xbf16>
    %1 = arith.extf %0 : vector<16x32xbf16> to vector<16x32xf32>
    %c0_1 = arith.constant 0 : index
    %c0_2 = arith.constant 0 : index
    %2 = vector.load %arg2[%c0_1, %c0_2] : memref<48x32xbf16, #tpu.memory_space<vmem>>, vector<48x32xbf16>
    %3 = arith.extf %2 : vector<48x32xbf16> to vector<48x32xf32>
    %c0_3 = arith.constant 0 : index
    %c0_4 = arith.constant 0 : index
    %4 = vector.load %arg0[%c0_3, %c0_4] : memref<48x2xi32, #tpu.memory_space<vmem>>, vector<48x2xi32>
    %5 = vector.extract_strided_slice %4 {offsets = [0, 0], sizes = [48, 1], strides = [1, 1]} : vector<48x2xi32> to vector<48x1xi32>
    %6 = vector.extract_strided_slice %4 {offsets = [0, 1], sizes = [48, 1], strides = [1, 1]} : vector<48x2xi32> to vector<48x1xi32>
    %c0_5 = arith.constant 0 : index
    %c0_6 = arith.constant 0 : index
    %c0_7 = arith.constant 0 : index
    %7 = vector.load %arg4[%c0_5, %c0_6, %c0_7] : memref<2x32x64xf32, #tpu.memory_space<vmem>>, vector<2x32x64xf32>
    %c0_8 = arith.constant 0 : index
    %c0_9 = arith.constant 0 : index
    %c0_10 = arith.constant 0 : index
    %8 = vector.load %arg5[%c0_8, %c0_9, %c0_10] : memref<2x64x32xf32, #tpu.memory_space<vmem>>, vector<2x64x32xf32>
    %c0_11 = arith.constant 0 : index
    %c0_12 = arith.constant 0 : index
    %9 = vector.load %arg6[%c0_11, %c0_12] : memref<4x64xf32, #tpu.memory_space<vmem>>, vector<4x64xf32>
    %c0_13 = arith.constant 0 : index
    %c0_14 = arith.constant 0 : index
    %10 = vector.load %arg7[%c0_13, %c0_14] : memref<4x32xf32, #tpu.memory_space<vmem>>, vector<4x32xf32>
    %c0_15 = arith.constant 0 : index
    %c0_16 = arith.constant 0 : index
    %11 = vector.load %arg3[%c0_15, %c0_16] : memref<32x192xf32, #tpu.memory_space<vmem>>, vector<32x192xf32>
    %cst = arith.constant dense<0.000000e+00> : vector<16x192xf32>
    %12 = tpu.matmul %1, %11, %cst {dimension_numbers = #tpu.dot_dimension_numbers<[1], [0], [0], [1], [0, 0, 1, 1], [], []>} : vector<16x32xf32>, vector<32x192xf32>, vector<16x192xf32> -> vector<16x192xf32>
    %13 = vector.extract_strided_slice %12 {offsets = [0, 0], sizes = [16, 64], strides = [1, 1]} : vector<16x192xf32> to vector<16x64xf32>
    %14 = vector.extract_strided_slice %12 {offsets = [0, 64], sizes = [16, 64], strides = [1, 1]} : vector<16x192xf32> to vector<16x64xf32>
    %15 = vector.extract_strided_slice %12 {offsets = [0, 128], sizes = [16, 64], strides = [1, 1]} : vector<16x192xf32> to vector<16x64xf32>
    %16 = tpu.iota {dimensions = array<i32: 1>} : vector<48x16xi32>
    %17 = vector.broadcast %5 : vector<48x1xi32> to vector<48x16xi32>
    %18 = arith.cmpi eq, %17, %16 : vector<48x16xi32>
    %19 = arith.extui %18 : vector<48x16xi1> to vector<48x16xi32>
    %20 = arith.sitofp %19 : vector<48x16xi32> to vector<48x16xf32>
    %21 = vector.broadcast %6 : vector<48x1xi32> to vector<48x16xi32>
    %22 = arith.cmpi eq, %21, %16 : vector<48x16xi32>
    %23 = arith.extui %22 : vector<48x16xi1> to vector<48x16xi32>
    %24 = arith.sitofp %23 : vector<48x16xi32> to vector<48x16xf32>
    %25 = arith.addf %20, %24 : vector<48x16xf32>
    %26 = tpu.concatenate %20, %25 in 1 : vector<48x16xf32>, vector<48x16xf32> -> vector<48x32xf32>
    %27 = tpu.concatenate %13, %14 in 0 : vector<16x64xf32>, vector<16x64xf32> -> vector<32x64xf32>
    %28 = vector.extract_strided_slice %7 {offsets = [0, 0, 0], sizes = [1, 32, 64], strides = [1, 1, 1]} : vector<2x32x64xf32> to vector<1x32x64xf32>
    %29 = vector.shape_cast %28 : vector<1x32x64xf32> to vector<32x64xf32>
    %cst_17 = arith.constant dense<0.000000e+00> : vector<48x64xf32>
    %30 = tpu.matmul %3, %29, %cst_17 {dimension_numbers = #tpu.dot_dimension_numbers<[1], [0], [0], [1], [0, 0, 1, 1], [], []>} : vector<48x32xf32>, vector<32x64xf32>, vector<48x64xf32> -> vector<48x64xf32>
    %cst_18 = arith.constant dense<0.000000e+00> : vector<48x64xf32>
    %31 = tpu.matmul %26, %27, %cst_18 {dimension_numbers = #tpu.dot_dimension_numbers<[1], [0], [0], [1], [0, 0, 1, 1], [], []>} : vector<48x32xf32>, vector<32x64xf32>, vector<48x64xf32> -> vector<48x64xf32>
    %32 = arith.addf %30, %31 : vector<48x64xf32>
    %33 = vector.extract_strided_slice %9 {offsets = [0, 0], sizes = [1, 64], strides = [1, 1]} : vector<4x64xf32> to vector<1x64xf32>
    %34 = vector.extract_strided_slice %9 {offsets = [1, 0], sizes = [1, 64], strides = [1, 1]} : vector<4x64xf32> to vector<1x64xf32>
    %cst_19 = arith.constant dense<0.000000e+00> : vector<64xf32>
    %35 = vector.multi_reduction <add>, %32, %cst_19 [0] : vector<48x64xf32> to vector<64xf32>
    %36 = vector.shape_cast %35 : vector<64xf32> to vector<1x64xf32>
    %cst_20 = arith.constant 4.800000e+01 : f32
    %37 = vector.broadcast %cst_20 : f32 to vector<1x64xf32>
    %38 = arith.divf %36, %37 : vector<1x64xf32>
    %39 = arith.mulf %32, %32 : vector<48x64xf32>
    %cst_21 = arith.constant dense<0.000000e+00> : vector<64xf32>
    %40 = vector.multi_reduction <add>, %39, %cst_21 [0] : vector<48x64xf32> to vector<64xf32>
    %41 = vector.shape_cast %40 : vector<64xf32> to vector<1x64xf32>
    %cst_22 = arith.constant 4.800000e+01 : f32
    %42 = vector.broadcast %cst_22 : f32 to vector<1x64xf32>
    %43 = arith.divf %41, %42 : vector<1x64xf32>
    %44 = arith.mulf %38, %38 : vector<1x64xf32>
    %45 = arith.subf %43, %44 : vector<1x64xf32>
    %cst_23 = arith.constant 0.000000e+00 : f32
    %46 = vector.broadcast %cst_23 : f32 to vector<1x64xf32>
    %47 = arith.maximumf %45, %46 : vector<1x64xf32>
    %48 = vector.broadcast %38 : vector<1x64xf32> to vector<48x64xf32>
    %49 = arith.subf %32, %48 : vector<48x64xf32>
    %cst_24 = arith.constant 9.99999974E-6 : f32
    %50 = vector.broadcast %cst_24 : f32 to vector<1x64xf32>
    %51 = arith.addf %47, %50 : vector<1x64xf32>
    %52 = math.rsqrt %51 : vector<1x64xf32>
    %53 = vector.broadcast %52 : vector<1x64xf32> to vector<48x64xf32>
    %54 = arith.mulf %49, %53 : vector<48x64xf32>
    %55 = vector.broadcast %33 : vector<1x64xf32> to vector<48x64xf32>
    %56 = arith.mulf %54, %55 : vector<48x64xf32>
    %57 = vector.broadcast %34 : vector<1x64xf32> to vector<48x64xf32>
    %58 = arith.addf %56, %57 : vector<48x64xf32>
    %cst_25 = arith.constant 0.000000e+00 : f32
    %59 = vector.broadcast %cst_25 : f32 to vector<48x64xf32>
    %60 = arith.maximumf %58, %59 : vector<48x64xf32>
    %61 = vector.extract_strided_slice %8 {offsets = [0, 0, 0], sizes = [1, 64, 32], strides = [1, 1, 1]} : vector<2x64x32xf32> to vector<1x64x32xf32>
    %62 = vector.shape_cast %61 : vector<1x64x32xf32> to vector<64x32xf32>
    %cst_26 = arith.constant dense<0.000000e+00> : vector<48x32xf32>
    %63 = tpu.matmul %60, %62, %cst_26 {dimension_numbers = #tpu.dot_dimension_numbers<[1], [0], [0], [1], [0, 0, 1, 1], [], []>} : vector<48x64xf32>, vector<64x32xf32>, vector<48x32xf32> -> vector<48x32xf32>
    %64 = vector.extract_strided_slice %10 {offsets = [0, 0], sizes = [1, 32], strides = [1, 1]} : vector<4x32xf32> to vector<1x32xf32>
    %65 = vector.extract_strided_slice %10 {offsets = [1, 0], sizes = [1, 32], strides = [1, 1]} : vector<4x32xf32> to vector<1x32xf32>
    %cst_27 = arith.constant dense<0.000000e+00> : vector<32xf32>
    %66 = vector.multi_reduction <add>, %63, %cst_27 [0] : vector<48x32xf32> to vector<32xf32>
    %67 = vector.shape_cast %66 : vector<32xf32> to vector<1x32xf32>
    %cst_28 = arith.constant 4.800000e+01 : f32
    %68 = vector.broadcast %cst_28 : f32 to vector<1x32xf32>
    %69 = arith.divf %67, %68 : vector<1x32xf32>
    %70 = arith.mulf %63, %63 : vector<48x32xf32>
    %cst_29 = arith.constant dense<0.000000e+00> : vector<32xf32>
    %71 = vector.multi_reduction <add>, %70, %cst_29 [0] : vector<48x32xf32> to vector<32xf32>
    %72 = vector.shape_cast %71 : vector<32xf32> to vector<1x32xf32>
    %cst_30 = arith.constant 4.800000e+01 : f32
    %73 = vector.broadcast %cst_30 : f32 to vector<1x32xf32>
    %74 = arith.divf %72, %73 : vector<1x32xf32>
    %75 = arith.mulf %69, %69 : vector<1x32xf32>
    %76 = arith.subf %74, %75 : vector<1x32xf32>
    %cst_31 = arith.constant 0.000000e+00 : f32
    %77 = vector.broadcast %cst_31 : f32 to vector<1x32xf32>
    %78 = arith.maximumf %76, %77 : vector<1x32xf32>
    %79 = vector.broadcast %69 : vector<1x32xf32> to vector<48x32xf32>
    %80 = arith.subf %63, %79 : vector<48x32xf32>
    %cst_32 = arith.constant 9.99999974E-6 : f32
    %81 = vector.broadcast %cst_32 : f32 to vector<1x32xf32>
    %82 = arith.addf %78, %81 : vector<1x32xf32>
    %83 = math.rsqrt %82 : vector<1x32xf32>
    %84 = vector.broadcast %83 : vector<1x32xf32> to vector<48x32xf32>
    %85 = arith.mulf %80, %84 : vector<48x32xf32>
    %86 = vector.broadcast %64 : vector<1x32xf32> to vector<48x32xf32>
    %87 = arith.mulf %85, %86 : vector<48x32xf32>
    %88 = vector.broadcast %65 : vector<1x32xf32> to vector<48x32xf32>
    %89 = arith.addf %87, %88 : vector<48x32xf32>
    %cst_33 = arith.constant 0.000000e+00 : f32
    %90 = vector.broadcast %cst_33 : f32 to vector<48x32xf32>
    %91 = arith.maximumf %89, %90 : vector<48x32xf32>
    %c0_34 = arith.constant 0 : index
    %c0_35 = arith.constant 0 : index
    %92 = vector.load %arg9[%c0_34, %c0_35] : memref<48x32xf32, #tpu.memory_space<vmem>>, vector<48x32xf32>
    tpu.vector_store %arg9[%c0_34, %c0_35], %91 {strides = array<i32>} : memref<48x32xf32, #tpu.memory_space<vmem>>, vector<48x32xf32>,
    %cst_36 = arith.constant dense<0.000000e+00> : vector<16x32xf32>
    %93 = tpu.matmul %20, %91, %cst_36 {dimension_numbers = #tpu.dot_dimension_numbers<[0], [0], [1], [1], [0, 1, 1, 1], [], []>} : vector<48x16xf32>, vector<48x32xf32>, vector<16x32xf32> -> vector<16x32xf32>
    %94 = vector.extract_strided_slice %7 {offsets = [1, 0, 0], sizes = [1, 32, 64], strides = [1, 1, 1]} : vector<2x32x64xf32> to vector<1x32x64xf32>
    %95 = vector.shape_cast %94 : vector<1x32x64xf32> to vector<32x64xf32>
    %cst_37 = arith.constant dense<0.000000e+00> : vector<16x64xf32>
    %96 = tpu.matmul %93, %95, %cst_37 {dimension_numbers = #tpu.dot_dimension_numbers<[1], [0], [0], [1], [0, 0, 1, 1], [], []>} : vector<16x32xf32>, vector<32x64xf32>, vector<16x64xf32> -> vector<16x64xf32>
    %97 = arith.addf %15, %96 : vector<16x64xf32>
    %98 = vector.extract_strided_slice %9 {offsets = [2, 0], sizes = [1, 64], strides = [1, 1]} : vector<4x64xf32> to vector<1x64xf32>
    %99 = vector.extract_strided_slice %9 {offsets = [3, 0], sizes = [1, 64], strides = [1, 1]} : vector<4x64xf32> to vector<1x64xf32>
    %cst_38 = arith.constant dense<0.000000e+00> : vector<64xf32>
    %100 = vector.multi_reduction <add>, %97, %cst_38 [0] : vector<16x64xf32> to vector<64xf32>
    %101 = vector.shape_cast %100 : vector<64xf32> to vector<1x64xf32>
    %cst_39 = arith.constant 1.600000e+01 : f32
    %102 = vector.broadcast %cst_39 : f32 to vector<1x64xf32>
    %103 = arith.divf %101, %102 : vector<1x64xf32>
    %104 = arith.mulf %97, %97 : vector<16x64xf32>
    %cst_40 = arith.constant dense<0.000000e+00> : vector<64xf32>
    %105 = vector.multi_reduction <add>, %104, %cst_40 [0] : vector<16x64xf32> to vector<64xf32>
    %106 = vector.shape_cast %105 : vector<64xf32> to vector<1x64xf32>
    %cst_41 = arith.constant 1.600000e+01 : f32
    %107 = vector.broadcast %cst_41 : f32 to vector<1x64xf32>
    %108 = arith.divf %106, %107 : vector<1x64xf32>
    %109 = arith.mulf %103, %103 : vector<1x64xf32>
    %110 = arith.subf %108, %109 : vector<1x64xf32>
    %cst_42 = arith.constant 0.000000e+00 : f32
    %111 = vector.broadcast %cst_42 : f32 to vector<1x64xf32>
    %112 = arith.maximumf %110, %111 : vector<1x64xf32>
    %113 = vector.broadcast %103 : vector<1x64xf32> to vector<16x64xf32>
    %114 = arith.subf %97, %113 : vector<16x64xf32>
    %cst_43 = arith.constant 9.99999974E-6 : f32
    %115 = vector.broadcast %cst_43 : f32 to vector<1x64xf32>
    %116 = arith.addf %112, %115 : vector<1x64xf32>
    %117 = math.rsqrt %116 : vector<1x64xf32>
    %118 = vector.broadcast %117 : vector<1x64xf32> to vector<16x64xf32>
    %119 = arith.mulf %114, %118 : vector<16x64xf32>
    %120 = vector.broadcast %98 : vector<1x64xf32> to vector<16x64xf32>
    %121 = arith.mulf %119, %120 : vector<16x64xf32>
    %122 = vector.broadcast %99 : vector<1x64xf32> to vector<16x64xf32>
    %123 = arith.addf %121, %122 : vector<16x64xf32>
    %cst_44 = arith.constant 0.000000e+00 : f32
    %124 = vector.broadcast %cst_44 : f32 to vector<16x64xf32>
    %125 = arith.maximumf %123, %124 : vector<16x64xf32>
    %126 = vector.extract_strided_slice %8 {offsets = [1, 0, 0], sizes = [1, 64, 32], strides = [1, 1, 1]} : vector<2x64x32xf32> to vector<1x64x32xf32>
    %127 = vector.shape_cast %126 : vector<1x64x32xf32> to vector<64x32xf32>
    %cst_45 = arith.constant dense<0.000000e+00> : vector<16x32xf32>
    %128 = tpu.matmul %125, %127, %cst_45 {dimension_numbers = #tpu.dot_dimension_numbers<[1], [0], [0], [1], [0, 0, 1, 1], [], []>} : vector<16x64xf32>, vector<64x32xf32>, vector<16x32xf32> -> vector<16x32xf32>
    %129 = vector.extract_strided_slice %10 {offsets = [2, 0], sizes = [1, 32], strides = [1, 1]} : vector<4x32xf32> to vector<1x32xf32>
    %130 = vector.extract_strided_slice %10 {offsets = [3, 0], sizes = [1, 32], strides = [1, 1]} : vector<4x32xf32> to vector<1x32xf32>
    %cst_46 = arith.constant dense<0.000000e+00> : vector<32xf32>
    %131 = vector.multi_reduction <add>, %128, %cst_46 [0] : vector<16x32xf32> to vector<32xf32>
    %132 = vector.shape_cast %131 : vector<32xf32> to vector<1x32xf32>
    %cst_47 = arith.constant 1.600000e+01 : f32
    %133 = vector.broadcast %cst_47 : f32 to vector<1x32xf32>
    %134 = arith.divf %132, %133 : vector<1x32xf32>
    %135 = arith.mulf %128, %128 : vector<16x32xf32>
    %cst_48 = arith.constant dense<0.000000e+00> : vector<32xf32>
    %136 = vector.multi_reduction <add>, %135, %cst_48 [0] : vector<16x32xf32> to vector<32xf32>
    %137 = vector.shape_cast %136 : vector<32xf32> to vector<1x32xf32>
    %cst_49 = arith.constant 1.600000e+01 : f32
    %138 = vector.broadcast %cst_49 : f32 to vector<1x32xf32>
    %139 = arith.divf %137, %138 : vector<1x32xf32>
    %140 = arith.mulf %134, %134 : vector<1x32xf32>
    %141 = arith.subf %139, %140 : vector<1x32xf32>
    %cst_50 = arith.constant 0.000000e+00 : f32
    %142 = vector.broadcast %cst_50 : f32 to vector<1x32xf32>
    %143 = arith.maximumf %141, %142 : vector<1x32xf32>
    %144 = vector.broadcast %134 : vector<1x32xf32> to vector<16x32xf32>
    %145 = arith.subf %128, %144 : vector<16x32xf32>
    %cst_51 = arith.constant 9.99999974E-6 : f32
    %146 = vector.broadcast %cst_51 : f32 to vector<1x32xf32>
    %147 = arith.addf %143, %146 : vector<1x32xf32>
    %148 = math.rsqrt %147 : vector<1x32xf32>
    %149 = vector.broadcast %148 : vector<1x32xf32> to vector<16x32xf32>
    %150 = arith.mulf %145, %149 : vector<16x32xf32>
    %151 = vector.broadcast %129 : vector<1x32xf32> to vector<16x32xf32>
    %152 = arith.mulf %150, %151 : vector<16x32xf32>
    %153 = vector.broadcast %130 : vector<1x32xf32> to vector<16x32xf32>
    %154 = arith.addf %152, %153 : vector<16x32xf32>
    %cst_52 = arith.constant 0.000000e+00 : f32
    %155 = vector.broadcast %cst_52 : f32 to vector<16x32xf32>
    %156 = arith.maximumf %154, %155 : vector<16x32xf32>
    %c0_53 = arith.constant 0 : index
    %c0_54 = arith.constant 0 : index
    %157 = vector.load %arg8[%c0_53, %c0_54] : memref<16x32xf32, #tpu.memory_space<vmem>>, vector<16x32xf32>
    tpu.vector_store %arg8[%c0_53, %c0_54], %156 {strides = array<i32>} : memref<16x32xf32, #tpu.memory_space<vmem>>, vector<16x32xf32>,
    return
  }
}

</mosaic_0001>

<llo_original>
// kernel: edge_node_forward.1
$region0: #{edge_node_forward.1}
  #allocation0 [shape = 'u32[]', space=smem, size = 0x4, offset = 0x4, fixed_abs, tag = 'smem constant byte address 0x4 - core index']
  #allocation1 [shape = 'u32[144,128]{1,0:T(1,128)}', space=vmem, size = 0x12000, scoped, tag = 'internal scratch']
  %s0 = inlined_call_operand.vmem [shape: s32[48,2], index: 0, kind: input, shape index: {}]
  %s1 = inlined_call_operand.vmem [shape: bf16[16,32], index: 1, kind: input, shape index: {}]
  %s2 = inlined_call_operand.vmem [shape: bf16[48,32], index: 2, kind: input, shape index: {}]
  %s3 = inlined_call_operand.vmem [shape: f32[32,192], index: 3, kind: input, shape index: {}]
  %s4 = inlined_call_operand.vmem [shape: f32[2,32,64], index: 4, kind: input, shape index: {}]
  %s5 = inlined_call_operand.vmem [shape: f32[2,64,32], index: 5, kind: input, shape index: {}]
  %s6 = inlined_call_operand.vmem [shape: f32[4,64], index: 6, kind: input, shape index: {}]
  %s7 = inlined_call_operand.vmem [shape: f32[4,32], index: 7, kind: input, shape index: {}]
  %s8 = inlined_call_operand.hbm [shape: f32[16,32], index: 8, kind: output, shape index: {0}]
  %s9 = inlined_call_operand.vmem [shape: f32[48,32], index: 9, kind: output, shape index: {1}]
  %10 = xla_tuple %s8, %s9
  %s11 = sld [smem:[#allocation0]]
  $region50: #{edge_node_forward.1} parent=0
    _
  %s13 = ssub.s32 1, %s11
  %s14 = scalar_select 0, %s13, %s11
  $region1: #{edge_node_forward.1} parent=0
    #allocation2 [shape = 'u8[8192]{0}', space=vmem, size = 0x2000, scoped, tag = 'output window, operand 0, single buffered']
    #allocation3 [shape = 's32[1]{0}', space=sflag, size = 0x4, scoped, tag = 'scoped memory for edge_node_forward.1']
    %15 = vsyncpa [#allocation3], 0
    // Predicated region
    $region2: #{edge_node_forward.1} parent=1 // pred_check
      _
    $region3: #{edge_node_forward.1} parent=1 // pred_check_branch
      %17 = sbr.rel (0) target = $region5
    $region4: #{edge_node_forward.1} parent=1 // pred_region
      _
    $region5: #{edge_node_forward.1} parent=1 // pred_fallthru
      _
    // Predicated region
    $region6: #{edge_node_forward.1} parent=1 // pred_check
      _
    $region7: #{edge_node_forward.1} parent=1 // pred_check_branch
      %19 = sbr.rel (0) target = $region9
    $region8: #{edge_node_forward.1} parent=1 // pred_region
      _
    $region9: #{edge_node_forward.1} parent=1 // pred_fallthru
      _
    // Predicated region
    $region10: #{edge_node_forward.1} parent=1 // pred_check
      _
    $region11: #{edge_node_forward.1} parent=1 // pred_check_branch
      %21 = sbr.rel (0) target = $region13
    $region12: #{edge_node_forward.1} parent=1 // pred_region
      _
    $region13: #{edge_node_forward.1} parent=1 // pred_fallthru
      _
    // Predicated region
    $region14: #{edge_node_forward.1} parent=1 // pred_check
      _
    $region15: #{edge_node_forward.1} parent=1 // pred_check_branch
      %23 = sbr.rel (0) target = $region17
    $region16: #{edge_node_forward.1} parent=1 // pred_region
      _
    $region17: #{edge_node_forward.1} parent=1 // pred_fallthru
      _
    // Predicated region
    $region18: #{edge_node_forward.1} parent=1 // pred_check
      _
    $region19: #{edge_node_forward.1} parent=1 // pred_check_branch
      %25 = sbr.rel (0) target = $region21
    $region20: #{edge_node_forward.1} parent=1 // pred_region
      _
    $region21: #{edge_node_forward.1} parent=1 // pred_fallthru
      _
    // Predicated region
    $region22: #{edge_node_forward.1} parent=1 // pred_check
      _
    $region23: #{edge_node_forward.1} parent=1 // pred_check_branch
      %27 = sbr.rel (0) target = $region25
    $region24: #{edge_node_forward.1} parent=1 // pred_region
      _
    $region25: #{edge_node_forward.1} parent=1 // pred_fallthru
      _
    // Predicated region
    $region26: #{edge_node_forward.1} parent=1 // pred_check
      _
    $region27: #{edge_node_forward.1} parent=1 // pred_check_branch
      %29 = sbr.rel (0) target = $region29
    $region28: #{edge_node_forward.1} parent=1 // pred_region
      _
    $region29: #{edge_node_forward.1} parent=1 // pred_fallthru
      _
    // Predicated region
    $region30: #{edge_node_forward.1} parent=1 // pred_check
      _
    $region31: #{edge_node_forward.1} parent=1 // pred_check_branch
      %31 = sbr.rel (0) target = $region33
    $region32: #{edge_node_forward.1} parent=1 // pred_region
      _
    $region33: #{edge_node_forward.1} parent=1 // pred_fallthru
      _
    %v32 = vld [vmem:[%s1] sm:$0xf]
    %v33 = vld [vmem:[%s1 + $0x4] sm:$0xf]
    %v34 = vunpack.c.l.bf16 %v32
    %v35 = vunpack.c.l.bf16 %v33
    %v36 = vld [vmem:[%s2] sm:$0xf]
    %v37 = vld [vmem:[%s2 + $0x4] sm:$0xf]
    %v38 = vld [vmem:[%s2 + $0x8] sm:$0xf]
    %v39 = vld [vmem:[%s2 + $0xc] sm:$0xf]
    %v40 = vld [vmem:[%s2 + $0x10] sm:$0xf]
    %v41 = vld [vmem:[%s2 + $0x14] sm:$0xf]
    %v42 = vunpack.c.l.bf16 %v36
    %v43 = vunpack.c.l.bf16 %v37
    %v44 = vunpack.c.l.bf16 %v38
    %v45 = vunpack.c.l.bf16 %v39
    %v46 = vunpack.c.l.bf16 %v40
    %v47 = vunpack.c.l.bf16 %v41
    %v48 = vld [vmem:[%s0] sm:$0xff]
    %v49 = vld [vmem:[%s0 + $0x8] sm:$0xff]
    %v50 = vld [vmem:[%s0 + $0x10] sm:$0xff]
    %v51 = vld [vmem:[%s0 + $0x18] sm:$0xff]
    %v52 = vld [vmem:[%s0 + $0x20] sm:$0xff]
    %v53 = vld [vmem:[%s0 + $0x28] sm:$0xff]
    %v54 = vld [vmem:[%s4] sm:$0xff]
    %v55 = vld [vmem:[%s4 + $0x8] sm:$0xff]
    %v56 = vld [vmem:[%s4 + $0x10] sm:$0xff]
    %v57 = vld [vmem:[%s4 + $0x18] sm:$0xff]
    %v58 = vld [vmem:[%s4 + $0x20] sm:$0xff]
    %v59 = vld [vmem:[%s4 + $0x28] sm:$0xff]
    %v60 = vld [vmem:[%s4 + $0x30] sm:$0xff]
    %v61 = vld [vmem:[%s4 + $0x38] sm:$0xff]
    %v62 = vld [vmem:[%s5] sm:$0xff]
    %v63 = vld [vmem:[%s5 + $0x8] sm:$0xff]
    %v64 = vld [vmem:[%s5 + $0x10] sm:$0xff]
    %v65 = vld [vmem:[%s5 + $0x18] sm:$0xff]
    %v66 = vld [vmem:[%s5 + $0x20] sm:$0xff]
    %v67 = vld [vmem:[%s5 + $0x28] sm:$0xff]
    %v68 = vld [vmem:[%s5 + $0x30] sm:$0xff]
    %v69 = vld [vmem:[%s5 + $0x38] sm:$0xff]
    %v70 = vld [vmem:[%s5 + $0x40] sm:$0xff]
    %v71 = vld [vmem:[%s5 + $0x48] sm:$0xff]
    %v72 = vld [vmem:[%s5 + $0x50] sm:$0xff]
    %v73 = vld [vmem:[%s5 + $0x58] sm:$0xff]
    %v74 = vld [vmem:[%s5 + $0x60] sm:$0xff]
    %v75 = vld [vmem:[%s5 + $0x68] sm:$0xff]
    %v76 = vld [vmem:[%s5 + $0x70] sm:$0xff]
    %v77 = vld [vmem:[%s5 + $0x78] sm:$0xff]
    %v78 = vld [vmem:[%s6] sm:$0xf]
    %v79 = vld [vmem:[%s7] sm:$0xf]
    %v80 = vld [vmem:[%s3] sm:$0xff]
    %v81 = vld [vmem:[%s3 + $0x8] sm:$0xff]
    %v82 = vld [vmem:[%s3 + $0x10] sm:$0xff]
    %v83 = vld [vmem:[%s3 + $0x18] sm:$0xff]
    %v84 = vld [vmem:[%s3 + $0x20] sm:$0xff]
    %v85 = vld [vmem:[%s3 + $0x28] sm:$0xff]
    %v86 = vld [vmem:[%s3 + $0x30] sm:$0xff]
    %v87 = vld [vmem:[%s3 + $0x38] sm:$0xff]
    %vm88 = vcmask 261120
    %v90 = vsel %vm88, %v34, 0
    %v93 = vsel %vm88, %v35, 0
    %95 = vmatprep.subr.mxu0 0.0
    %96 = vmatpush1.msra.mxu0 0.0
    %97 = vmatprep.subr.mxu0 0.0
    %98 = vmatpush1.msra.mxu0 0.0
    %99 = vmatprep.subr.mxu0 0.0
    %100 = vmatpush1.msra.mxu0 0.0
    %101 = vmatprep.subr.mxu0 0.0
    %102 = vmatpush1.msra.mxu0 0.0
    %103 = vmatprep.subr.mxu0 0.0
    %104 = vmatpush1.msra.mxu0 0.0
    %105 = vmatprep.subr.mxu0 0.0
    %106 = vmatpush1.msra.mxu0 0.0
    %107 = vmatprep.subr.mxu0 0.0
    %108 = vmatpush1.msra.mxu0 0.0
    %109 = vmatprep.subr.mxu0 0.0
    %110 = vmatpush1.msra.mxu0 0.0
    %111 = vmatprep.subr.mxu0 0.0
    %112 = vmatpush1.msra.mxu0 0.0
    %113 = vmatprep.subr.mxu0 0.0
    %114 = vmatpush1.msra.mxu0 0.0
    %115 = vmatprep.subr.mxu0 0.0
    %116 = vmatpush1.msra.mxu0 0.0
    %117 = vmatprep.subr.mxu0 0.0
    %118 = vmatpush1.msra.mxu0 0.0
    %119 = vmatprep.subr.mxu0 %v87
    %120 = vmatpush1.msra.mxu0 %v86
    %121 = vmatprep.subr.mxu0 %v85
    %122 = vmatpush1.msra.mxu0 %v84
    %123 = vmatprep.subr.mxu0 %v83
    %124 = vmatpush1.msra.mxu0 %v82
    %125 = vmatprep.subr.mxu0 %v81
    %126 = vmatpush1.msra.mxu0 %v80
    %127 = vmatprep.subr.mxu0 0.0
    %128 = vmatpush2.msra.mxu0 0.0
    %129 = vmatprep.subr.mxu0 0.0
    %130 = vmatpush2.msra.mxu0 0.0
    %131 = vmatprep.subr.mxu0 0.0
    %132 = vmatpush2.msra.mxu0 0.0
    %133 = vmatprep.subr.mxu0 0.0
    %134 = vmatpush2.msra.mxu0 0.0
    %135 = vmatprep.subr.mxu0 0.0
    %136 = vmatpush2.msra.mxu0 0.0
    %137 = vmatprep.subr.mxu0 0.0
    %138 = vmatpush2.msra.mxu0 0.0
    %139 = vmatprep.subr.mxu0 0.0
    %140 = vmatpush2.msra.mxu0 0.0
    %141 = vmatprep.subr.mxu0 0.0
    %142 = vmatpush2.msra.mxu0 0.0
    %143 = vmatprep.subr.mxu0 0.0
    %144 = vmatpush2.msra.mxu0 0.0
    %145 = vmatprep.subr.mxu0 0.0
    %146 = vmatpush2.msra.mxu0 0.0
    %147 = vmatprep.subr.mxu0 0.0
    %148 = vmatpush2.msra.mxu0 0.0
    %149 = vmatprep.subr.mxu0 0.0
    %150 = vmatpush2.msra.mxu0 0.0
    %151 = vmatprep.subr.mxu0 0.0
    %152 = vmatpush2.msra.mxu0 0.0
    %153 = vmatprep.subr.mxu0 0.0
    %154 = vmatpush2.msra.mxu0 0.0
    %155 = vmatprep.subr.mxu0 0.0
    %156 = vmatpush2.msra.mxu0 0.0
    %157 = vmatprep.subr.mxu0 0.0
    %158 = vmatpush2.msra.mxu0 0.0
    %159 = vmatprep.mubr.f32.mxu0 0.0
    %160 = vmatmul.mubr.f32.gmra.mxu0 %v90
    %v161 = vpop.f32.mrf.mxu0
    %v162 = vadd.f32 0.0, %v161
    %v163 = vpop.f32.mrf.mxu0
    %v164 = vadd.f32 0.0, %v163
    %165 = vmatprep.mubr.f32.mxu0 0.0
    %166 = vmatmul.mubr.f32.gmra.mxu0 %v93
    %v167 = vpop.f32.mrf.mxu0
    %v168 = vadd.f32 0.0, %v167
    %v169 = vpop.f32.mrf.mxu0
    %v170 = vadd.f32 0.0, %v169
    %171 = vdwg.mxu0
    %v172 = vlaneseq
    %v173 = vand.u32 %v172, 127
    %174 = vset.pattern.permute.xlu0 0
    %175 = vperm.xlu0 %174, %v48
    %v176 = vpop.permute.xlu0 %175
    %177 = vset.pattern.permute.xlu0 0
    %178 = vperm.xlu0 %177, %v49
    %v179 = vpop.permute.xlu0 %178
    %180 = vset.pattern.permute.xlu0 0
    %181 = vperm.xlu0 %180, %v50
    %v182 = vpop.permute.xlu0 %181
    %183 = vset.pattern.permute.xlu0 0
    %184 = vperm.xlu0 %183, %v51
    %v185 = vpop.permute.xlu0 %184
    %186 = vset.pattern.permute.xlu0 0
    %187 = vperm.xlu0 %186, %v52
    %v188 = vpop.permute.xlu0 %187
    %189 = vset.pattern.permute.xlu0 0
    %190 = vperm.xlu0 %189, %v53
    %v191 = vpop.permute.xlu0 %190
    %vm192 = vcmp.eq.s32.totalorder %v176, %v173
    %vm193 = vcmp.eq.s32.totalorder %v179, %v173
    %vm194 = vcmp.eq.s32.totalorder %v182, %v173
    %vm195 = vcmp.eq.s32.totalorder %v185, %v173
    %vm196 = vcmp.eq.s32.totalorder %v188, %v173
    %vm197 = vcmp.eq.s32.totalorder %v191, %v173
    %v198 = vsel %vm192, 1, 0
    %v199 = vsel %vm193, 1, 0
    %v200 = vsel %vm194, 1, 0
    %v201 = vsel %vm195, 1, 0
    %v202 = vsel %vm196, 1, 0
    %v203 = vsel %vm197, 1, 0
    %v204 = vcvt.s32.f32 %v198
    %v205 = vcvt.s32.f32 %v199
    %v206 = vcvt.s32.f32 %v200
    %v207 = vcvt.s32.f32 %v201
    %v208 = vcvt.s32.f32 %v202
    %v209 = vcvt.s32.f32 %v203
    %210 = vset.pattern.permute.xlu0 1
    %211 = vperm.xlu0 %210, %v48
    %v212 = vpop.permute.xlu0 %211
    %213 = vset.pattern.permute.xlu0 1
    %214 = vperm.xlu0 %213, %v49
    %v215 = vpop.permute.xlu0 %214
    %216 = vset.pattern.permute.xlu0 1
    %217 = vperm.xlu0 %216, %v50
    %v218 = vpop.permute.xlu0 %217
    %219 = vset.pattern.permute.xlu0 1
    %220 = vperm.xlu0 %219, %v51
    %v221 = vpop.permute.xlu0 %220
    %222 = vset.pattern.permute.xlu0 1
    %223 = vperm.xlu0 %222, %v52
    %v224 = vpop.permute.xlu0 %223
    %225 = vset.pattern.permute.xlu0 1
    %226 = vperm.xlu0 %225, %v53
    %v227 = vpop.permute.xlu0 %226
    %vm228 = vcmp.eq.s32.totalorder %v212, %v173
    %vm229 = vcmp.eq.s32.totalorder %v215, %v173
    %vm230 = vcmp.eq.s32.totalorder %v218, %v173
    %vm231 = vcmp.eq.s32.totalorder %v221, %v173
    %vm232 = vcmp.eq.s32.totalorder %v224, %v173
    %vm233 = vcmp.eq.s32.totalorder %v227, %v173
    %v234 = vsel %vm228, 1, 0
    %v235 = vsel %vm229, 1, 0
    %v236 = vsel %vm230, 1, 0
    %v237 = vsel %vm231, 1, 0
    %v238 = vsel %vm232, 1, 0
    %v239 = vsel %vm233, 1, 0
    %v240 = vcvt.s32.f32 %v234
    %v241 = vcvt.s32.f32 %v235
    %v242 = vcvt.s32.f32 %v236
    %v243 = vcvt.s32.f32 %v237
    %v244 = vcvt.s32.f32 %v238
    %v245 = vcvt.s32.f32 %v239
    %v246 = vadd.f32 %v204, %v240
    %v247 = vadd.f32 %v205, %v241
    %v248 = vadd.f32 %v206, %v242
    %v249 = vadd.f32 %v207, %v243
    %v250 = vadd.f32 %v208, %v244
    %v251 = vadd.f32 %v209, %v245
    %258 = vrot.lane.b32.xlu0 %v246, 16
    %v259 = vpop.permute.xlu0 %258
    %260 = vrot.lane.b32.xlu0 %v247, 16
    %v261 = vpop.permute.xlu0 %260
    %262 = vrot.lane.b32.xlu0 %v248, 16
    %v263 = vpop.permute.xlu0 %262
    %264 = vrot.lane.b32.xlu0 %v249, 16
    %v265 = vpop.permute.xlu0 %264
    %266 = vrot.lane.b32.xlu0 %v250, 16
    %v267 = vpop.permute.xlu0 %266
    %268 = vrot.lane.b32.xlu0 %v251, 16
    %v269 = vpop.permute.xlu0 %268
    %vm276 = vcmask 130048
    %v277 = vsel %vm276, %v204, %v259
    %v278 = vsel %vm276, %v205, %v261
    %v279 = vsel %vm276, %v206, %v263
    %v280 = vsel %vm276, %v207, %v265
    %v281 = vsel %vm276, %v208, %v267
    %v282 = vsel %vm276, %v209, %v269
    %285 = vrot.lane.b32.xlu0 %v162, 64
    %v286 = vpop.permute.xlu0 %285
    %287 = vrot.lane.b32.xlu0 %v168, 64
    %v288 = vpop.permute.xlu0 %287
    %v292 = vsel %vm88, %v277, 0
    %v295 = vsel %vm88, %v278, 0
    %v298 = vsel %vm88, %v279, 0
    %v301 = vsel %vm88, %v280, 0
    %v304 = vsel %vm88, %v281, 0
    %v307 = vsel %vm88, %v282, 0
    %309 = vmatprep.subr.mxu0 0.0
    %310 = vmatpush1.msra.mxu0 0.0
    %311 = vmatprep.subr.mxu0 0.0
    %312 = vmatpush1.msra.mxu0 0.0
    %313 = vmatprep.subr.mxu0 0.0
    %314 = vmatpush1.msra.mxu0 0.0
    %315 = vmatprep.subr.mxu0 0.0
    %316 = vmatpush1.msra.mxu0 0.0
    %317 = vmatprep.subr.mxu0 0.0
    %318 = vmatpush1.msra.mxu0 0.0
    %319 = vmatprep.subr.mxu0 0.0
    %320 = vmatpush1.msra.mxu0 0.0
    %321 = vmatprep.subr.mxu0 0.0
    %322 = vmatpush1.msra.mxu0 0.0
    %323 = vmatprep.subr.mxu0 0.0
    %324 = vmatpush1.msra.mxu0 0.0
    %325 = vmatprep.subr.mxu0 0.0
    %326 = vmatpush1.msra.mxu0 0.0
    %327 = vmatprep.subr.mxu0 0.0
    %328 = vmatpush1.msra.mxu0 0.0
    %329 = vmatprep.subr.mxu0 0.0
    %330 = vmatpush1.msra.mxu0 0.0
    %331 = vmatprep.subr.mxu0 0.0
    %332 = vmatpush1.msra.mxu0 0.0
    %333 = vmatprep.subr.mxu0 0.0
    %334 = vmatpush1.msra.mxu0 %v288
    %335 = vmatprep.subr.mxu0 0.0
    %336 = vmatpush1.msra.mxu0 %v286
    %337 = vmatprep.subr.mxu0 0.0
    %338 = vmatpush1.msra.mxu0 %v168
    %339 = vmatprep.subr.mxu0 0.0
    %340 = vmatpush1.msra.mxu0 %v162
    %341 = vmatprep.subr.mxu0 0.0
    %342 = vmatpush2.msra.mxu0 0.0
    %343 = vmatprep.subr.mxu0 0.0
    %344 = vmatpush2.msra.mxu0 0.0
    %345 = vmatprep.subr.mxu0 0.0
    %346 = vmatpush2.msra.mxu0 0.0
    %347 = vmatprep.subr.mxu0 0.0
    %348 = vmatpush2.msra.mxu0 0.0
    %349 = vmatprep.subr.mxu0 0.0
    %350 = vmatpush2.msra.mxu0 0.0
    %351 = vmatprep.subr.mxu0 0.0
    %352 = vmatpush2.msra.mxu0 0.0
    %353 = vmatprep.subr.mxu0 0.0
    %354 = vmatpush2.msra.mxu0 0.0
    %355 = vmatprep.subr.mxu0 0.0
    %356 = vmatpush2.msra.mxu0 0.0
    %357 = vmatprep.subr.mxu0 0.0
    %358 = vmatpush2.msra.mxu0 0.0
    %359 = vmatprep.subr.mxu0 0.0
    %360 = vmatpush2.msra.mxu0 0.0
    %361 = vmatprep.subr.mxu0 0.0
    %362 = vmatpush2.msra.mxu0 0.0
    %363 = vmatprep.subr.mxu0 0.0
    %364 = vmatpush2.msra.mxu0 0.0
    %365 = vmatprep.subr.mxu0 0.0
    %366 = vmatpush2.msra.mxu0 0.0
    %367 = vmatprep.subr.mxu0 0.0
    %368 = vmatpush2.msra.mxu0 0.0
    %369 = vmatprep.subr.mxu0 0.0
    %370 = vmatpush2.msra.mxu0 0.0
    %371 = vmatprep.subr.mxu0 0.0
    %372 = vmatpush2.msra.mxu0 0.0
    %373 = vmatprep.mubr.f32.mxu0 0.0
    %374 = vmatmul.mubr.f32.gmra.mxu0 %v292
    %v375 = vpop.f32.mrf.mxu0
    %v376 = vadd.f32 0.0, %v375
    %v377 = vpop.f32.mrf.mxu0
    %378 = vmatprep.mubr.f32.mxu0 0.0
    %379 = vmatmul.mubr.f32.gmra.mxu0 %v295
    %v380 = vpop.f32.mrf.mxu0
    %v381 = vadd.f32 0.0, %v380
    %v382 = vpop.f32.mrf.mxu0
    %383 = vmatprep.mubr.f32.mxu0 0.0
    %384 = vmatmul.mubr.f32.gmra.mxu0 %v298
    %v385 = vpop.f32.mrf.mxu0
    %v386 = vadd.f32 0.0, %v385
    %v387 = vpop.f32.mrf.mxu0
    %388 = vmatprep.mubr.f32.mxu0 0.0
    %389 = vmatmul.mubr.f32.gmra.mxu0 %v301
    %v390 = vpop.f32.mrf.mxu0
    %v391 = vadd.f32 0.0, %v390
    %v392 = vpop.f32.mrf.mxu0
    %393 = vmatprep.mubr.f32.mxu0 0.0
    %394 = vmatmul.mubr.f32.gmra.mxu0 %v304
    %v395 = vpop.f32.mrf.mxu0
    %v396 = vadd.f32 0.0, %v395
    %v397 = vpop.f32.mrf.mxu0
    %398 = vmatprep.mubr.f32.mxu0 0.0
    %399 = vmatmul.mubr.f32.gmra.mxu0 %v307
    %v400 = vpop.f32.mrf.mxu0
    %v401 = vadd.f32 0.0, %v400
    %v402 = vpop.f32.mrf.mxu0
    %403 = vdwg.mxu0
    %v405 = vsel %vm88, %v42, 0
    %v408 = vsel %vm88, %v43, 0
    %v411 = vsel %vm88, %v44, 0
    %v414 = vsel %vm88, %v45, 0
    %v417 = vsel %vm88, %v46, 0
    %v420 = vsel %vm88, %v47, 0
    %422 = vmatprep.subr.mxu0 0.0
    %423 = vmatpush1.msra.mxu0 0.0
    %424 = vmatprep.subr.mxu0 0.0
    %425 = vmatpush1.msra.mxu0 0.0
    %426 = vmatprep.subr.mxu0 0.0
    %427 = vmatpush1.msra.mxu0 0.0
    %428 = vmatprep.subr.mxu0 0.0
    %429 = vmatpush1.msra.mxu0 0.0
    %430 = vmatprep.subr.mxu0 0.0
    %431 = vmatpush1.msra.mxu0 0.0
    %432 = vmatprep.subr.mxu0 0.0
    %433 = vmatpush1.msra.mxu0 0.0
    %434 = vmatprep.subr.mxu0 0.0
    %435 = vmatpush1.msra.mxu0 0.0
    %436 = vmatprep.subr.mxu0 0.0
    %437 = vmatpush1.msra.mxu0 0.0
    %438 = vmatprep.subr.mxu0 0.0
    %439 = vmatpush1.msra.mxu0 0.0
    %440 = vmatprep.subr.mxu0 0.0
    %441 = vmatpush1.msra.mxu0 0.0
    %442 = vmatprep.subr.mxu0 0.0
    %443 = vmatpush1.msra.mxu0 0.0
    %444 = vmatprep.subr.mxu0 0.0
    %445 = vmatpush1.msra.mxu0 0.0
    %446 = vmatprep.subr.mxu0 0.0
    %447 = vmatpush1.msra.mxu0 %v57
    %448 = vmatprep.subr.mxu0 0.0
    %449 = vmatpush1.msra.mxu0 %v56
    %450 = vmatprep.subr.mxu0 0.0
    %451 = vmatpush1.msra.mxu0 %v55
    %452 = vmatprep.subr.mxu0 0.0
    %453 = vmatpush1.msra.mxu0 %v54
    %454 = vmatprep.subr.mxu0 0.0
    %455 = vmatpush2.msra.mxu0 0.0
    %456 = vmatprep.subr.mxu0 0.0
    %457 = vmatpush2.msra.mxu0 0.0
    %458 = vmatprep.subr.mxu0 0.0
    %459 = vmatpush2.msra.mxu0 0.0
    %460 = vmatprep.subr.mxu0 0.0
    %461 = vmatpush2.msra.mxu0 0.0
    %462 = vmatprep.subr.mxu0 0.0
    %463 = vmatpush2.msra.mxu0 0.0
    %464 = vmatprep.subr.mxu0 0.0
    %465 = vmatpush2.msra.mxu0 0.0
    %466 = vmatprep.subr.mxu0 0.0
    %467 = vmatpush2.msra.mxu0 0.0
    %468 = vmatprep.subr.mxu0 0.0
    %469 = vmatpush2.msra.mxu0 0.0
    %470 = vmatprep.subr.mxu0 0.0
    %471 = vmatpush2.msra.mxu0 0.0
    %472 = vmatprep.subr.mxu0 0.0
    %473 = vmatpush2.msra.mxu0 0.0
    %474 = vmatprep.subr.mxu0 0.0
    %475 = vmatpush2.msra.mxu0 0.0
    %476 = vmatprep.subr.mxu0 0.0
    %477 = vmatpush2.msra.mxu0 0.0
    %478 = vmatprep.subr.mxu0 0.0
    %479 = vmatpush2.msra.mxu0 0.0
    %480 = vmatprep.subr.mxu0 0.0
    %481 = vmatpush2.msra.mxu0 0.0
    %482 = vmatprep.subr.mxu0 0.0
    %483 = vmatpush2.msra.mxu0 0.0
    %484 = vmatprep.subr.mxu0 0.0
    %485 = vmatpush2.msra.mxu0 0.0
    %486 = vmatprep.mubr.f32.mxu0 0.0
    %487 = vmatmul.mubr.f32.gmra.mxu0 %v405
    %v488 = vpop.f32.mrf.mxu0
    %v489 = vadd.f32 %v376, %v488
    %v490 = vpop.f32.mrf.mxu0
    %491 = vmatprep.mubr.f32.mxu0 0.0
    %492 = vmatmul.mubr.f32.gmra.mxu0 %v408
    %v493 = vpop.f32.mrf.mxu0
    %v494 = vadd.f32 %v381, %v493
    %v495 = vpop.f32.mrf.mxu0
    %496 = vmatprep.mubr.f32.mxu0 0.0
    %497 = vmatmul.mubr.f32.gmra.mxu0 %v411
    %v498 = vpop.f32.mrf.mxu0
    %v499 = vadd.f32 %v386, %v498
    %v500 = vpop.f32.mrf.mxu0
    %501 = vmatprep.mubr.f32.mxu0 0.0
    %502 = vmatmul.mubr.f32.gmra.mxu0 %v414
    %v503 = vpop.f32.mrf.mxu0
    %v504 = vadd.f32 %v391, %v503
    %v505 = vpop.f32.mrf.mxu0
    %506 = vmatprep.mubr.f32.mxu0 0.0
    %507 = vmatmul.mubr.f32.gmra.mxu0 %v417
    %v508 = vpop.f32.mrf.mxu0
    %v509 = vadd.f32 %v396, %v508
    %v510 = vpop.f32.mrf.mxu0
    %511 = vmatprep.mubr.f32.mxu0 0.0
    %512 = vmatmul.mubr.f32.gmra.mxu0 %v420
    %v513 = vpop.f32.mrf.mxu0
    %v514 = vadd.f32 %v401, %v513
    %v515 = vpop.f32.mrf.mxu0
    %516 = vdwg.mxu0
    %vm517 = vcmask 523264
    %v518 = vsel %vm517, %v489, 0.0
    %v519 = vsel %vm517, %v494, 0.0
    %v520 = vadd.f32 %v518, %v519
    %v521 = vsel %vm517, %v499, 0.0
    %v522 = vadd.f32 %v520, %v521
    %v523 = vsel %vm517, %v504, 0.0
    %v524 = vadd.f32 %v522, %v523
    %v525 = vsel %vm517, %v509, 0.0
    %v526 = vadd.f32 %v524, %v525
    %v527 = vsel %vm517, %v514, 0.0
    %v528 = vadd.f32 %v526, %v527
    %v529 = vrot.slane %v528, 4
    %v530 = vadd.f32 %v528, %v529
    %v531 = vrot.slane %v530, 2
    %v532 = vadd.f32 %v530, %v531
    %v533 = vrot.slane %v532, 1
    %v534 = vadd.f32 %v532, %v533
    %v535 = vrcp.pop 48.0
    %v536 = vmul.f32 %v534, %v535
    %v537 = vmul.f32 %v489, %v489
    %v538 = vmul.f32 %v494, %v494
    %v539 = vmul.f32 %v499, %v499
    %v540 = vmul.f32 %v504, %v504
    %v541 = vmul.f32 %v509, %v509
    %v542 = vmul.f32 %v514, %v514
    %v543 = vsel %vm517, %v537, 0.0
    %v544 = vsel %vm517, %v538, 0.0
    %v545 = vadd.f32 %v543, %v544
    %v546 = vsel %vm517, %v539, 0.0
    %v547 = vadd.f32 %v545, %v546
    %v548 = vsel %vm517, %v540, 0.0
    %v549 = vadd.f32 %v547, %v548
    %v550 = vsel %vm517, %v541, 0.0
    %v551 = vadd.f32 %v549, %v550
    %v552 = vsel %vm517, %v542, 0.0
    %v553 = vadd.f32 %v551, %v552
    %v554 = vrot.slane %v553, 4
    %v555 = vadd.f32 %v553, %v554
    %v556 = vrot.slane %v555, 2
    %v557 = vadd.f32 %v555, %v556
    %v558 = vrot.slane %v557, 1
    %v559 = vadd.f32 %v557, %v558
    %v560 = vmul.f32 %v559, %v535
    %v561 = vmul.f32 %v536, %v536
    %v562 = vsub.f32 %v560, %v561
    %v563 = vmax.f32 %v562, 0.0
    %v564 = vsub.f32 %v489, %v536
    %v565 = vsub.f32 %v494, %v536
    %v566 = vsub.f32 %v499, %v536
    %v567 = vsub.f32 %v504, %v536
    %v568 = vsub.f32 %v509, %v536
    %v569 = vsub.f32 %v514, %v536
    %v570 = vadd.f32 %v563, 1e-05
    %v571 = vrsqrt.pop %v570
    %v572 = vmul.f32 %v564, %v571
    %v573 = vmul.f32 %v565, %v571
    %v574 = vmul.f32 %v566, %v571
    %v575 = vmul.f32 %v567, %v571
    %v576 = vmul.f32 %v568, %v571
    %v577 = vmul.f32 %v569, %v571
    %v578 = vlaneseq
    %v579 = vshrl.u32 %v578, 7
    %v580 = vsub.s32 0, %v579
    %v581 = vrot.slane %v78, %v580
    %v582 = vmul.f32 %v572, %v581
    %v583 = vmul.f32 %v573, %v581
    %v584 = vmul.f32 %v574, %v581
    %v585 = vmul.f32 %v575, %v581
    %v586 = vmul.f32 %v576, %v581
    %v587 = vmul.f32 %v577, %v581
    %v588 = vlaneseq
    %v589 = vshrl.u32 %v588, 7
    %v590 = vsub.s32 1, %v589
    %v591 = vrot.slane %v78, %v590
    %v592 = vadd.f32 %v582, %v591
    %v593 = vadd.f32 %v583, %v591
    %v594 = vadd.f32 %v584, %v591
    %v595 = vadd.f32 %v585, %v591
    %v596 = vadd.f32 %v586, %v591
    %v597 = vadd.f32 %v587, %v591
    %v598 = vmax.f32 %v592, 0.0
    %v599 = vmax.f32 %v593, 0.0
    %v600 = vmax.f32 %v594, 0.0
    %v601 = vmax.f32 %v595, 0.0
    %v602 = vmax.f32 %v596, 0.0
    %v603 = vmax.f32 %v597, 0.0
    %v605 = vsel %vm517, %v598, 0
    %v608 = vsel %vm517, %v599, 0
    %v611 = vsel %vm517, %v600, 0
    %v614 = vsel %vm517, %v601, 0
    %v617 = vsel %vm517, %v602, 0
    %v620 = vsel %vm517, %v603, 0
    %622 = vmatprep.subr.mxu0 0.0
    %623 = vmatpush1.msra.mxu0 0.0
    %624 = vmatprep.subr.mxu0 0.0
    %625 = vmatpush1.msra.mxu0 0.0
    %626 = vmatprep.subr.mxu0 0.0
    %627 = vmatpush1.msra.mxu0 0.0
    %628 = vmatprep.subr.mxu0 0.0
    %629 = vmatpush1.msra.mxu0 0.0
    %630 = vmatprep.subr.mxu0 0.0
    %631 = vmatpush1.msra.mxu0 0.0
    %632 = vmatprep.subr.mxu0 0.0
    %633 = vmatpush1.msra.mxu0 0.0
    %634 = vmatprep.subr.mxu0 0.0
    %635 = vmatpush1.msra.mxu0 0.0
    %636 = vmatprep.subr.mxu0 0.0
    %637 = vmatpush1.msra.mxu0 0.0
    %638 = vmatprep.subr.mxu0 0.0
    %639 = vmatpush1.msra.mxu0 %v69
    %640 = vmatprep.subr.mxu0 0.0
    %641 = vmatpush1.msra.mxu0 %v68
    %642 = vmatprep.subr.mxu0 0.0
    %643 = vmatpush1.msra.mxu0 %v67
    %644 = vmatprep.subr.mxu0 0.0
    %645 = vmatpush1.msra.mxu0 %v66
    %646 = vmatprep.subr.mxu0 0.0
    %647 = vmatpush1.msra.mxu0 %v65
    %648 = vmatprep.subr.mxu0 0.0
    %649 = vmatpush1.msra.mxu0 %v64
    %650 = vmatprep.subr.mxu0 0.0
    %651 = vmatpush1.msra.mxu0 %v63
    %652 = vmatprep.subr.mxu0 0.0
    %653 = vmatpush1.msra.mxu0 %v62
    %654 = vmatprep.subr.mxu0 0.0
    %655 = vmatpush2.msra.mxu0 0.0
    %656 = vmatprep.subr.mxu0 0.0
    %657 = vmatpush2.msra.mxu0 0.0
    %658 = vmatprep.subr.mxu0 0.0
    %659 = vmatpush2.msra.mxu0 0.0
    %660 = vmatprep.subr.mxu0 0.0
    %661 = vmatpush2.msra.mxu0 0.0
    %662 = vmatprep.subr.mxu0 0.0
    %663 = vmatpush2.msra.mxu0 0.0
    %664 = vmatprep.subr.mxu0 0.0
    %665 = vmatpush2.msra.mxu0 0.0
    %666 = vmatprep.subr.mxu0 0.0
    %667 = vmatpush2.msra.mxu0 0.0
    %668 = vmatprep.subr.mxu0 0.0
    %669 = vmatpush2.msra.mxu0 0.0
    %670 = vmatprep.subr.mxu0 0.0
    %671 = vmatpush2.msra.mxu0 0.0
    %672 = vmatprep.subr.mxu0 0.0
    %673 = vmatpush2.msra.mxu0 0.0
    %674 = vmatprep.subr.mxu0 0.0
    %675 = vmatpush2.msra.mxu0 0.0
    %676 = vmatprep.subr.mxu0 0.0
    %677 = vmatpush2.msra.mxu0 0.0
    %678 = vmatprep.subr.mxu0 0.0
    %679 = vmatpush2.msra.mxu0 0.0
    %680 = vmatprep.subr.mxu0 0.0
    %681 = vmatpush2.msra.mxu0 0.0
    %682 = vmatprep.subr.mxu0 0.0
    %683 = vmatpush2.msra.mxu0 0.0
    %684 = vmatprep.subr.mxu0 0.0
    %685 = vmatpush2.msra.mxu0 0.0
    %686 = vmatprep.mubr.f32.mxu0 0.0
    %687 = vmatmul.mubr.f32.gmra.mxu0 %v605
    %v688 = vpop.f32.mrf.mxu0
    %v689 = vadd.f32 0.0, %v688
    %v690 = vpop.f32.mrf.mxu0
    %691 = vmatprep.mubr.f32.mxu0 0.0
    %692 = vmatmul.mubr.f32.gmra.mxu0 %v608
    %v693 = vpop.f32.mrf.mxu0
    %v694 = vadd.f32 0.0, %v693
    %v695 = vpop.f32.mrf.mxu0
    %696 = vmatprep.mubr.f32.mxu0 0.0
    %697 = vmatmul.mubr.f32.gmra.mxu0 %v611
    %v698 = vpop.f32.mrf.mxu0
    %v699 = vadd.f32 0.0, %v698
    %v700 = vpop.f32.mrf.mxu0
    %701 = vmatprep.mubr.f32.mxu0 0.0
    %702 = vmatmul.mubr.f32.gmra.mxu0 %v614
    %v703 = vpop.f32.mrf.mxu0
    %v704 = vadd.f32 0.0, %v703
    %v705 = vpop.f32.mrf.mxu0
    %706 = vmatprep.mubr.f32.mxu0 0.0
    %707 = vmatmul.mubr.f32.gmra.mxu0 %v617
    %v708 = vpop.f32.mrf.mxu0
    %v709 = vadd.f32 0.0, %v708
    %v710 = vpop.f32.mrf.mxu0
    %711 = vmatprep.mubr.f32.mxu0 0.0
    %712 = vmatmul.mubr.f32.gmra.mxu0 %v620
    %v713 = vpop.f32.mrf.mxu0
    %v714 = vadd.f32 0.0, %v713
    %v715 = vpop.f32.mrf.mxu0
    %716 = vdwg.mxu0
    %v717 = vsel %vm88, %v689, 0.0
    %v718 = vsel %vm88, %v694, 0.0
    %v719 = vadd.f32 %v717, %v718
    %v720 = vsel %vm88, %v699, 0.0
    %v721 = vadd.f32 %v719, %v720
    %v722 = vsel %vm88, %v704, 0.0
    %v723 = vadd.f32 %v721, %v722
    %v724 = vsel %vm88, %v709, 0.0
    %v725 = vadd.f32 %v723, %v724
    %v726 = vsel %vm88, %v714, 0.0
    %v727 = vadd.f32 %v725, %v726
    %v728 = vrot.slane %v727, 4
    %v729 = vadd.f32 %v727, %v728
    %v730 = vrot.slane %v729, 2
    %v731 = vadd.f32 %v729, %v730
    %v732 = vrot.slane %v731, 1
    %v733 = vadd.f32 %v731, %v732
    %v734 = vmul.f32 %v733, %v535
    %v735 = vmul.f32 %v689, %v689
    %v736 = vmul.f32 %v694, %v694
    %v737 = vmul.f32 %v699, %v699
    %v738 = vmul.f32 %v704, %v704
    %v739 = vmul.f32 %v709, %v709
    %v740 = vmul.f32 %v714, %v714
    %v741 = vsel %vm88, %v735, 0.0
    %v742 = vsel %vm88, %v736, 0.0
    %v743 = vadd.f32 %v741, %v742
    %v744 = vsel %vm88, %v737, 0.0
    %v745 = vadd.f32 %v743, %v744
    %v746 = vsel %vm88, %v738, 0.0
    %v747 = vadd.f32 %v745, %v746
    %v748 = vsel %vm88, %v739, 0.0
    %v749 = vadd.f32 %v747, %v748
    %v750 = vsel %vm88, %v740, 0.0
    %v751 = vadd.f32 %v749, %v750
    %v752 = vrot.slane %v751, 4
    %v753 = vadd.f32 %v751, %v752
    %v754 = vrot.slane %v753, 2
    %v755 = vadd.f32 %v753, %v754
    %v756 = vrot.slane %v755, 1
    %v757 = vadd.f32 %v755, %v756
    %v758 = vmul.f32 %v757, %v535
    %v759 = vmul.f32 %v734, %v734
    %v760 = vsub.f32 %v758, %v759
    %v761 = vmax.f32 %v760, 0.0
    %v762 = vsub.f32 %v689, %v734
    %v763 = vsub.f32 %v694, %v734
    %v764 = vsub.f32 %v699, %v734
    %v765 = vsub.f32 %v704, %v734
    %v766 = vsub.f32 %v709, %v734
    %v767 = vsub.f32 %v714, %v734
    %v768 = vadd.f32 %v761, 1e-05
    %v769 = vrsqrt.pop %v768
    %v770 = vmul.f32 %v762, %v769
    %v771 = vmul.f32 %v763, %v769
    %v772 = vmul.f32 %v764, %v769
    %v773 = vmul.f32 %v765, %v769
    %v774 = vmul.f32 %v766, %v769
    %v775 = vmul.f32 %v767, %v769
    %v776 = vlaneseq
    %v777 = vshrl.u32 %v776, 7
    %v778 = vsub.s32 0, %v777
    %v779 = vrot.slane %v79, %v778
    %v780 = vmul.f32 %v770, %v779
    %v781 = vmul.f32 %v771, %v779
    %v782 = vmul.f32 %v772, %v779
    %v783 = vmul.f32 %v773, %v779
    %v784 = vmul.f32 %v774, %v779
    %v785 = vmul.f32 %v775, %v779
    %v786 = vlaneseq
    %v787 = vshrl.u32 %v786, 7
    %v788 = vsub.s32 1, %v787
    %v789 = vrot.slane %v79, %v788
    %v790 = vadd.f32 %v780, %v789
    %v791 = vadd.f32 %v781, %v789
    %v792 = vadd.f32 %v782, %v789
    %v793 = vadd.f32 %v783, %v789
    %v794 = vadd.f32 %v784, %v789
    %v795 = vadd.f32 %v785, %v789
    %v796 = vmax.f32 %v790, 0.0
    %v797 = vmax.f32 %v791, 0.0
    %v798 = vmax.f32 %v792, 0.0
    %v799 = vmax.f32 %v793, 0.0
    %v800 = vmax.f32 %v794, 0.0
    %v801 = vmax.f32 %v795, 0.0
    %802 = vst.msk [vmem:[%s9] sm:$0xff] %vm88, %v796
    %803 = vst.msk [vmem:[%s9 + $0x8] sm:$0xff] %vm88, %v797
    %804 = vst.msk [vmem:[%s9 + $0x10] sm:$0xff] %vm88, %v798
    %805 = vst.msk [vmem:[%s9 + $0x18] sm:$0xff] %vm88, %v799
    %806 = vst.msk [vmem:[%s9 + $0x20] sm:$0xff] %vm88, %v800
    %807 = vst.msk [vmem:[%s9 + $0x28] sm:$0xff] %vm88, %v801
    %808 = vxpose.xlu0.b32.start [1/16] %v204, 128
    %809 = vxpose.xlu0.b32.cont [2/16] %v205, 128
    %810 = vxpose.xlu0.b32.cont [3/16] %v206, 128
    %811 = vxpose.xlu0.b32.cont [4/16] %v207, 128
    %812 = vxpose.xlu0.b32.cont [5/16] %v208, 128
    %813 = vxpose.xlu0.b32.cont [6/16] %v209, 128
    %814 = vxpose.xlu0.b32.cont [7/16] 0.0, 128
    %815 = vxpose.xlu0.b32.cont [8/16] 0.0, 128
    %816 = vxpose.xlu0.b32.cont [9/16] 0.0, 128
    %817 = vxpose.xlu0.b32.cont [10/16] 0.0, 128
    %818 = vxpose.xlu0.b32.cont [11/16] 0.0, 128
    %819 = vxpose.xlu0.b32.cont [12/16] 0.0, 128
    %820 = vxpose.xlu0.b32.cont [13/16] 0.0, 128
    %821 = vxpose.xlu0.b32.cont [14/16] 0.0, 128
    %822 = vxpose.xlu0.b32.cont [15/16] 0.0, 128
    %823 = vxpose.xlu0.b32.end [16/16] 0.0, 128
    %v824 = vpop.trf.xlu0
    %v825 = vpop.trf.xlu0
    %v826 = vpop.trf.xlu0
    %v827 = vpop.trf.xlu0
    %v828 = vpop.trf.xlu0
    %v829 = vpop.trf.xlu0
    %v830 = vpop.trf.xlu0
    %v831 = vpop.trf.xlu0
    %v832 = vpop.trf.xlu0
    %v833 = vpop.trf.xlu0
    %v834 = vpop.trf.xlu0
    %v835 = vpop.trf.xlu0
    %v836 = vpop.trf.xlu0
    %v837 = vpop.trf.xlu0
    %v838 = vpop.trf.xlu0
    %v839 = vpop.trf.xlu0
    %vm840 = vcmask 392192
    %v842 = vsel %vm840, %v824, 0
    %v845 = vsel %vm840, %v825, 0
    %847 = vmatprep.subr.mxu0 0.0
    %848 = vmatpush1.msra.mxu0 0.0
    %849 = vmatprep.subr.mxu0 0.0
    %850 = vmatpush1.msra.mxu0 0.0
    %851 = vmatprep.subr.mxu0 0.0
    %852 = vmatpush1.msra.mxu0 0.0
    %853 = vmatprep.subr.mxu0 0.0
    %854 = vmatpush1.msra.mxu0 0.0
    %855 = vmatprep.subr.mxu0 0.0
    %856 = vmatpush1.msra.mxu0 0.0
    %857 = vmatprep.subr.mxu0 0.0
    %858 = vmatpush1.msra.mxu0 0.0
    %859 = vmatprep.subr.mxu0 0.0
    %860 = vmatpush1.msra.mxu0 0.0
    %861 = vmatprep.subr.mxu0 0.0
    %862 = vmatpush1.msra.mxu0 0.0
    %863 = vmatprep.subr.mxu0 0.0
    %864 = vmatpush1.msra.mxu0 0.0
    %865 = vmatprep.subr.mxu0 0.0
    %866 = vmatpush1.msra.mxu0 0.0
    %867 = vmatprep.subr.mxu0 0.0
    %868 = vmatpush1.msra.mxu0 %v801
    %869 = vmatprep.subr.mxu0 0.0
    %870 = vmatpush1.msra.mxu0 %v800
    %871 = vmatprep.subr.mxu0 0.0
    %872 = vmatpush1.msra.mxu0 %v799
    %873 = vmatprep.subr.mxu0 0.0
    %874 = vmatpush1.msra.mxu0 %v798
    %875 = vmatprep.subr.mxu0 0.0
    %876 = vmatpush1.msra.mxu0 %v797
    %877 = vmatprep.subr.mxu0 0.0
    %878 = vmatpush1.msra.mxu0 %v796
    %879 = vmatprep.subr.mxu0 0.0
    %880 = vmatpush2.msra.mxu0 0.0
    %881 = vmatprep.subr.mxu0 0.0
    %882 = vmatpush2.msra.mxu0 0.0
    %883 = vmatprep.subr.mxu0 0.0
    %884 = vmatpush2.msra.mxu0 0.0
    %885 = vmatprep.subr.mxu0 0.0
    %886 = vmatpush2.msra.mxu0 0.0
    %887 = vmatprep.subr.mxu0 0.0
    %888 = vmatpush2.msra.mxu0 0.0
    %889 = vmatprep.subr.mxu0 0.0
    %890 = vmatpush2.msra.mxu0 0.0
    %891 = vmatprep.subr.mxu0 0.0
    %892 = vmatpush2.msra.mxu0 0.0
    %893 = vmatprep.subr.mxu0 0.0
    %894 = vmatpush2.msra.mxu0 0.0
    %895 = vmatprep.subr.mxu0 0.0
    %896 = vmatpush2.msra.mxu0 0.0
    %897 = vmatprep.subr.mxu0 0.0
    %898 = vmatpush2.msra.mxu0 0.0
    %899 = vmatprep.subr.mxu0 0.0
    %900 = vmatpush2.msra.mxu0 0.0
    %901 = vmatprep.subr.mxu0 0.0
    %902 = vmatpush2.msra.mxu0 0.0
    %903 = vmatprep.subr.mxu0 0.0
    %904 = vmatpush2.msra.mxu0 0.0
    %905 = vmatprep.subr.mxu0 0.0
    %906 = vmatpush2.msra.mxu0 0.0
    %907 = vmatprep.subr.mxu0 0.0
    %908 = vmatpush2.msra.mxu0 0.0
    %909 = vmatprep.subr.mxu0 0.0
    %910 = vmatpush2.msra.mxu0 0.0
    %911 = vmatprep.mubr.f32.mxu0 0.0
    %912 = vmatmul.mubr.f32.gmra.mxu0 %v842
    %v913 = vpop.f32.mrf.mxu0
    %v914 = vadd.f32 0.0, %v913
    %v915 = vpop.f32.mrf.mxu0
    %916 = vmatprep.mubr.f32.mxu0 0.0
    %917 = vmatmul.mubr.f32.gmra.mxu0 %v845
    %v918 = vpop.f32.mrf.mxu0
    %v919 = vadd.f32 0.0, %v918
    %v920 = vpop.f32.mrf.mxu0
    %921 = vdwg.mxu0
    %v923 = vsel %vm88, %v914, 0
    %v926 = vsel %vm88, %v919, 0
    %928 = vmatprep.subr.mxu0 0.0
    %929 = vmatpush1.msra.mxu0 0.0
    %930 = vmatprep.subr.mxu0 0.0
    %931 = vmatpush1.msra.mxu0 0.0
    %932 = vmatprep.subr.mxu0 0.0
    %933 = vmatpush1.msra.mxu0 0.0
    %934 = vmatprep.subr.mxu0 0.0
    %935 = vmatpush1.msra.mxu0 0.0
    %936 = vmatprep.subr.mxu0 0.0
    %937 = vmatpush1.msra.mxu0 0.0
    %938 = vmatprep.subr.mxu0 0.0
    %939 = vmatpush1.msra.mxu0 0.0
    %940 = vmatprep.subr.mxu0 0.0
    %941 = vmatpush1.msra.mxu0 0.0
    %942 = vmatprep.subr.mxu0 0.0
    %943 = vmatpush1.msra.mxu0 0.0
    %944 = vmatprep.subr.mxu0 0.0
    %945 = vmatpush1.msra.mxu0 0.0
    %946 = vmatprep.subr.mxu0 0.0
    %947 = vmatpush1.msra.mxu0 0.0
    %948 = vmatprep.subr.mxu0 0.0
    %949 = vmatpush1.msra.mxu0 0.0
    %950 = vmatprep.subr.mxu0 0.0
    %951 = vmatpush1.msra.mxu0 0.0
    %952 = vmatprep.subr.mxu0 0.0
    %953 = vmatpush1.msra.mxu0 %v61
    %954 = vmatprep.subr.mxu0 0.0
    %955 = vmatpush1.msra.mxu0 %v60
    %956 = vmatprep.subr.mxu0 0.0
    %957 = vmatpush1.msra.mxu0 %v59
    %958 = vmatprep.subr.mxu0 0.0
    %959 = vmatpush1.msra.mxu0 %v58
    %960 = vmatprep.subr.mxu0 0.0
    %961 = vmatpush2.msra.mxu0 0.0
    %962 = vmatprep.subr.mxu0 0.0
    %963 = vmatpush2.msra.mxu0 0.0
    %964 = vmatprep.subr.mxu0 0.0
    %965 = vmatpush2.msra.mxu0 0.0
    %966 = vmatprep.subr.mxu0 0.0
    %967 = vmatpush2.msra.mxu0 0.0
    %968 = vmatprep.subr.mxu0 0.0
    %969 = vmatpush2.msra.mxu0 0.0
    %970 = vmatprep.subr.mxu0 0.0
    %971 = vmatpush2.msra.mxu0 0.0
    %972 = vmatprep.subr.mxu0 0.0
    %973 = vmatpush2.msra.mxu0 0.0
    %974 = vmatprep.subr.mxu0 0.0
    %975 = vmatpush2.msra.mxu0 0.0
    %976 = vmatprep.subr.mxu0 0.0
    %977 = vmatpush2.msra.mxu0 0.0
    %978 = vmatprep.subr.mxu0 0.0
    %979 = vmatpush2.msra.mxu0 0.0
    %980 = vmatprep.subr.mxu0 0.0
    %981 = vmatpush2.msra.mxu0 0.0
    %982 = vmatprep.subr.mxu0 0.0
    %983 = vmatpush2.msra.mxu0 0.0
    %984 = vmatprep.subr.mxu0 0.0
    %985 = vmatpush2.msra.mxu0 0.0
    %986 = vmatprep.subr.mxu0 0.0
    %987 = vmatpush2.msra.mxu0 0.0
    %988 = vmatprep.subr.mxu0 0.0
    %989 = vmatpush2.msra.mxu0 0.0
    %990 = vmatprep.subr.mxu0 0.0
    %991 = vmatpush2.msra.mxu0 0.0
    %992 = vmatprep.mubr.f32.mxu0 0.0
    %993 = vmatmul.mubr.f32.gmra.mxu0 %v923
    %v994 = vpop.f32.mrf.mxu0
    %v995 = vadd.f32 0.0, %v994
    %v996 = vpop.f32.mrf.mxu0
    %997 = vmatprep.mubr.f32.mxu0 0.0
    %998 = vmatmul.mubr.f32.gmra.mxu0 %v926
    %v999 = vpop.f32.mrf.mxu0
    %v1000 = vadd.f32 0.0, %v999
    %v1001 = vpop.f32.mrf.mxu0
    %1002 = vdwg.mxu0
    %v1003 = vadd.f32 %v164, %v995
    %v1004 = vadd.f32 %v170, %v1000
    %v1005 = vsel %vm517, %v1003, 0.0
    %v1006 = vsel %vm517, %v1004, 0.0
    %v1007 = vadd.f32 %v1005, %v1006
    %v1008 = vrot.slane %v1007, 4
    %v1009 = vadd.f32 %v1007, %v1008
    %v1010 = vrot.slane %v1009, 2
    %v1011 = vadd.f32 %v1009, %v1010
    %v1012 = vrot.slane %v1011, 1
    %v1013 = vadd.f32 %v1011, %v1012
    %v1014 = vrcp.pop 16.0
    %v1015 = vmul.f32 %v1013, %v1014
    %v1016 = vmul.f32 %v1003, %v1003
    %v1017 = vmul.f32 %v1004, %v1004
    %v1018 = vsel %vm517, %v1016, 0.0
    %v1019 = vsel %vm517, %v1017, 0.0
    %v1020 = vadd.f32 %v1018, %v1019
    %v1021 = vrot.slane %v1020, 4
    %v1022 = vadd.f32 %v1020, %v1021
    %v1023 = vrot.slane %v1022, 2
    %v1024 = vadd.f32 %v1022, %v1023
    %v1025 = vrot.slane %v1024, 1
    %v1026 = vadd.f32 %v1024, %v1025
    %v1027 = vmul.f32 %v1026, %v1014
    %v1028 = vmul.f32 %v1015, %v1015
    %v1029 = vsub.f32 %v1027, %v1028
    %v1030 = vmax.f32 %v1029, 0.0
    %v1031 = vsub.f32 %v1003, %v1015
    %v1032 = vsub.f32 %v1004, %v1015
    %v1033 = vadd.f32 %v1030, 1e-05
    %v1034 = vrsqrt.pop %v1033
    %v1035 = vmul.f32 %v1031, %v1034
    %v1036 = vmul.f32 %v1032, %v1034
    %v1037 = vlaneseq
    %v1038 = vshrl.u32 %v1037, 7
    %v1039 = vsub.s32 2, %v1038
    %v1040 = vrot.slane %v78, %v1039
    %v1041 = vmul.f32 %v1035, %v1040
    %v1042 = vmul.f32 %v1036, %v1040
    %v1043 = vlaneseq
    %v1044 = vshrl.u32 %v1043, 7
    %v1045 = vsub.s32 3, %v1044
    %v1046 = vrot.slane %v78, %v1045
    %v1047 = vadd.f32 %v1041, %v1046
    %v1048 = vadd.f32 %v1042, %v1046
    %v1049 = vmax.f32 %v1047, 0.0
    %v1050 = vmax.f32 %v1048, 0.0
    %v1052 = vsel %vm517, %v1049, 0
    %v1055 = vsel %vm517, %v1050, 0
    %1057 = vmatprep.subr.mxu0 0.0
    %1058 = vmatpush1.msra.mxu0 0.0
    %1059 = vmatprep.subr.mxu0 0.0
    %1060 = vmatpush1.msra.mxu0 0.0
    %1061 = vmatprep.subr.mxu0 0.0
    %1062 = vmatpush1.msra.mxu0 0.0
    %1063 = vmatprep.subr.mxu0 0.0
    %1064 = vmatpush1.msra.mxu0 0.0
    %1065 = vmatprep.subr.mxu0 0.0
    %1066 = vmatpush1.msra.mxu0 0.0
    %1067 = vmatprep.subr.mxu0 0.0
    %1068 = vmatpush1.msra.mxu0 0.0
    %1069 = vmatprep.subr.mxu0 0.0
    %1070 = vmatpush1.msra.mxu0 0.0
    %1071 = vmatprep.subr.mxu0 0.0
    %1072 = vmatpush1.msra.mxu0 0.0
    %1073 = vmatprep.subr.mxu0 0.0
    %1074 = vmatpush1.msra.mxu0 %v77
    %1075 = vmatprep.subr.mxu0 0.0
    %1076 = vmatpush1.msra.mxu0 %v76
    %1077 = vmatprep.subr.mxu0 0.0
    %1078 = vmatpush1.msra.mxu0 %v75
    %1079 = vmatprep.subr.mxu0 0.0
    %1080 = vmatpush1.msra.mxu0 %v74
    %1081 = vmatprep.subr.mxu0 0.0
    %1082 = vmatpush1.msra.mxu0 %v73
    %1083 = vmatprep.subr.mxu0 0.0
    %1084 = vmatpush1.msra.mxu0 %v72
    %1085 = vmatprep.subr.mxu0 0.0
    %1086 = vmatpush1.msra.mxu0 %v71
    %1087 = vmatprep.subr.mxu0 0.0
    %1088 = vmatpush1.msra.mxu0 %v70
    %1089 = vmatprep.subr.mxu0 0.0
    %1090 = vmatpush2.msra.mxu0 0.0
    %1091 = vmatprep.subr.mxu0 0.0
    %1092 = vmatpush2.msra.mxu0 0.0
    %1093 = vmatprep.subr.mxu0 0.0
    %1094 = vmatpush2.msra.mxu0 0.0
    %1095 = vmatprep.subr.mxu0 0.0
    %1096 = vmatpush2.msra.mxu0 0.0
    %1097 = vmatprep.subr.mxu0 0.0
    %1098 = vmatpush2.msra.mxu0 0.0
    %1099 = vmatprep.subr.mxu0 0.0
    %1100 = vmatpush2.msra.mxu0 0.0
    %1101 = vmatprep.subr.mxu0 0.0
    %1102 = vmatpush2.msra.mxu0 0.0
    %1103 = vmatprep.subr.mxu0 0.0
    %1104 = vmatpush2.msra.mxu0 0.0
    %1105 = vmatprep.subr.mxu0 0.0
    %1106 = vmatpush2.msra.mxu0 0.0
    %1107 = vmatprep.subr.mxu0 0.0
    %1108 = vmatpush2.msra.mxu0 0.0
    %1109 = vmatprep.subr.mxu0 0.0
    %1110 = vmatpush2.msra.mxu0 0.0
    %1111 = vmatprep.subr.mxu0 0.0
    %1112 = vmatpush2.msra.mxu0 0.0
    %1113 = vmatprep.subr.mxu0 0.0
    %1114 = vmatpush2.msra.mxu0 0.0
    %1115 = vmatprep.subr.mxu0 0.0
    %1116 = vmatpush2.msra.mxu0 0.0
    %1117 = vmatprep.subr.mxu0 0.0
    %1118 = vmatpush2.msra.mxu0 0.0
    %1119 = vmatprep.subr.mxu0 0.0
    %1120 = vmatpush2.msra.mxu0 0.0
    %1121 = vmatprep.mubr.f32.mxu0 0.0
    %1122 = vmatmul.mubr.f32.gmra.mxu0 %v1052
    %v1123 = vpop.f32.mrf.mxu0
    %v1124 = vadd.f32 0.0, %v1123
    %v1125 = vpop.f32.mrf.mxu0
    %1126 = vmatprep.mubr.f32.mxu0 0.0
    %1127 = vmatmul.mubr.f32.gmra.mxu0 %v1055
    %v1128 = vpop.f32.mrf.mxu0
    %v1129 = vadd.f32 0.0, %v1128
    %v1130 = vpop.f32.mrf.mxu0
    %1131 = vdwg.mxu0
    %v1132 = vsel %vm88, %v1124, 0.0
    %v1133 = vsel %vm88, %v1129, 0.0
    %v1134 = vadd.f32 %v1132, %v1133
    %v1135 = vrot.slane %v1134, 4
    %v1136 = vadd.f32 %v1134, %v1135
    %v1137 = vrot.slane %v1136, 2
    %v1138 = vadd.f32 %v1136, %v1137
    %v1139 = vrot.slane %v1138, 1
    %v1140 = vadd.f32 %v1138, %v1139
    %v1141 = vmul.f32 %v1140, %v1014
    %v1142 = vmul.f32 %v1124, %v1124
    %v1143 = vmul.f32 %v1129, %v1129
    %v1144 = vsel %vm88, %v1142, 0.0
    %v1145 = vsel %vm88, %v1143, 0.0
    %v1146 = vadd.f32 %v1144, %v1145
    %v1147 = vrot.slane %v1146, 4
    %v1148 = vadd.f32 %v1146, %v1147
    %v1149 = vrot.slane %v1148, 2
    %v1150 = vadd.f32 %v1148, %v1149
    %v1151 = vrot.slane %v1150, 1
    %v1152 = vadd.f32 %v1150, %v1151
    %v1153 = vmul.f32 %v1152, %v1014
    %v1154 = vmul.f32 %v1141, %v1141
    %v1155 = vsub.f32 %v1153, %v1154
    %v1156 = vmax.f32 %v1155, 0.0
    %v1157 = vsub.f32 %v1124, %v1141
    %v1158 = vsub.f32 %v1129, %v1141
    %v1159 = vadd.f32 %v1156, 1e-05
    %v1160 = vrsqrt.pop %v1159
    %v1161 = vmul.f32 %v1157, %v1160
    %v1162 = vmul.f32 %v1158, %v1160
    %v1163 = vlaneseq
    %v1164 = vshrl.u32 %v1163, 7
    %v1165 = vsub.s32 2, %v1164
    %v1166 = vrot.slane %v79, %v1165
    %v1167 = vmul.f32 %v1161, %v1166
    %v1168 = vmul.f32 %v1162, %v1166
    %v1169 = vlaneseq
    %v1170 = vshrl.u32 %v1169, 7
    %v1171 = vsub.s32 3, %v1170
    %v1172 = vrot.slane %v79, %v1171
    %v1173 = vadd.f32 %v1167, %v1172
    %v1174 = vadd.f32 %v1168, %v1172
    %v1175 = vmax.f32 %v1173, 0.0
    %v1176 = vmax.f32 %v1174, 0.0
    %1177 = vst.msk [vmem:[#allocation2] sm:$0xff] %vm88, %v1175
    %1178 = vst.msk [vmem:[#allocation2 + $0x8] sm:$0xff] %vm88, %v1176
    // Predicated region
    $region34: #{edge_node_forward.1} parent=1 // pred_check
      _
    $region35: #{edge_node_forward.1} parent=1 // pred_check_branch
      %1180 = sbr.rel (0) target = $region37
    $region36: #{edge_node_forward.1} parent=1 // pred_region
      %s1182 = ssub.s32 256, 256
      %1183 = vsyncadd [#allocation3], %s1182
      %s1184 = sshll.u32 [#allocation2], 4
      %s1185 = int_to_ptr.vmem [resolvable:$true] %s1184
      %1190 = dma.vmem_to_hbm [thread:$0]  %s1185, 256, %s8, [#allocation3], 128, 128, 8
    $region37: #{edge_node_forward.1} parent=1 // pred_fallthru
      _
    // Predicated region
    $region38: #{edge_node_forward.1} parent=1 // pred_check
      _
    $region39: #{edge_node_forward.1} parent=1 // pred_check_branch
      %1192 = sbr.rel (0) target = $region41
    $region40: #{edge_node_forward.1} parent=1 // pred_region
      _
    $region41: #{edge_node_forward.1} parent=1 // pred_fallthru
      _
    // Predicated region
    $region42: #{edge_node_forward.1} parent=1 // pred_check
      _
    $region43: #{edge_node_forward.1} parent=1 // pred_check_branch
      %1194 = sbr.rel (0) target = $region45
    $region44: #{edge_node_forward.1} parent=1 // pred_region
      %1195 = dma.done [#allocation3], 256
    $region45: #{edge_node_forward.1} parent=1 // pred_fallthru
      _
    // Predicated region
    $region46: #{edge_node_forward.1} parent=1 // pred_check
      _
    $region47: #{edge_node_forward.1} parent=1 // pred_check_branch
      %1197 = sbr.rel (0) target = $region49
    $region48: #{edge_node_forward.1} parent=1 // pred_region
      _
    $region49: #{edge_node_forward.1} parent=1 // pred_fallthru
      _
    %1198 = vsyncpa [#allocation3], 1

</llo_original>
